<compile_context>
chip_gen: v5e
topology: v5e:2x2
jax: 0.10.0
libtpu: 0.0.40
codegen_flags: <defaults>
</compile_context>

<pallas_src>
import functools

import jax
import jax.numpy as jnp
from jax.experimental import pallas as pl
from jax.experimental.pallas import tpu as pltpu


# ----------------------------- Pallas kernels ------------------------------ #

def _backbone_kernel(x_ref, w_ref, b_ref, o_ref):
    """Shared 1x1-conv + ReLU backbone, one pixel tile per grid step.

    x_ref: (Cin, TILE_N)   channel-major pixel tile (pixels on lanes)
    w_ref: (Cout, Cin)     weights, resident across the whole grid
    b_ref: (Cout, 1)       bias, resident
    o_ref: (Cout, TILE_N)  lane-dense output tile
    """
    y = jnp.dot(w_ref[...], x_ref[...], preferred_element_type=jnp.float32)
    o_ref[...] = jnp.maximum(y + b_ref[...], 0.0).astype(o_ref.dtype)


def _xcorr_scores_kernel(z_ref, x_ref, s_ref):
    """All-pairs (template position x search position) scores on the MXU.

    z_ref: (1, Pz, C)   template features, pixel-major
    x_ref: (1, C, Px)   search features, channel-major
    s_ref: (1, Pz, Px)  scores, lane-dense along the Px search positions
    """
    s_ref[0] = jnp.dot(z_ref[0], x_ref[0], preferred_element_type=jnp.float32)


def _shift_sum_kernel(s_ref, o_ref, *, hz, wz, ho, wo, out_scale, out_bias):
    """Fold the all-pairs scores into the SiamFC response map.

    resp[i, j] = sum_{dy, dx} s[dy*wz + dx, i + dy, j + dx]
    The affine output head (out_scale / out_bias) is fused into the store.

    s_ref: (1, Pz, Hx, Wx)   o_ref: (1, Ho, Wo)
    """
    acc = jnp.zeros((ho, wo), jnp.float32)
    for dy in range(hz):
        for dx in range(wz):
            q = dy * wz + dx
            acc = acc + s_ref[0, q, dy:dy + ho, dx:dx + wo]
    o_ref[0] = (acc * out_scale + out_bias).astype(o_ref.dtype)


# ------------------------------- wrappers ---------------------------------- #

def _shared_backbone(z_nchw, x_nchw, w, b, *, tile_n=128):
    """Run template + search through the shared backbone in ONE pallas_call.

    Returns channel-major feature slabs (Cout, B*Pz) and (Cout, B*Px).
    tile_n: pixels per grid step (multiple of 128; raise to 512-1024 for large
    inputs — blocks stay far under the v7x 64 MiB VMEM budget either way).
    """
    B, C, Hz, Wz = z_nchw.shape
    _, _, Hx, Wx = x_nchw.shape
    Cout = w.shape[1]
    Pz, Px = Hz * Wz, Hx * Wx

    # One entry transpose per branch: NCHW -> channel-major pixel stream.
    z_cm = jnp.transpose(z_nchw.reshape(B, C, Pz), (1, 0, 2)).reshape(C, B * Pz)
    x_cm = jnp.transpose(x_nchw.reshape(B, C, Px), (1, 0, 2)).reshape(C, B * Px)
    feats = jnp.concatenate([z_cm, x_cm], axis=1)                # (C, Ntot)

    n_tot = feats.shape[1]
    grid_n = pl.cdiv(n_tot, tile_n)
    n_pad = grid_n * tile_n
    if n_pad != n_tot:                                           # ragged remainder
        feats = jnp.pad(feats, ((0, 0), (0, n_pad - n_tot)))

    out = pl.pallas_call(
        _backbone_kernel,
        out_shape=jax.ShapeDtypeStruct((Cout, n_pad), jnp.float32),
        grid=(grid_n,),
        in_specs=[
            pl.BlockSpec((C, tile_n), lambda i: (0, i)),   # pixel tiles stream through
            pl.BlockSpec((Cout, C), lambda i: (0, 0)),     # weights stay resident
            pl.BlockSpec((Cout, 1), lambda i: (0, 0)),     # bias stays resident
        ],
        out_specs=pl.BlockSpec((Cout, tile_n), lambda i: (0, i)),
        compiler_params=pltpu.CompilerParams(
            dimension_semantics=("parallel",)),
    )(feats, jnp.transpose(w), b.reshape(Cout, 1))

    zf = out[:, :B * Pz]                       # (Cout, B*Pz)
    xf = out[:, B * Pz:B * Pz + B * Px]        # (Cout, B*Px)
    return zf, xf


def _siamese_xcorr(zf_cm, xf_cm, B, Cout, Hz, Wz, Hx, Wx, out_scale, out_bias):
    """SiamFC cross-correlation from compact feature maps (no HBM im2col)."""
    Pz, Px = Hz * Wz, Hx * Wx
    Ho, Wo = Hx - Hz + 1, Wx - Wz + 1

    # Small layout fix-ups on the compact feature maps only (tiny vs. the old
    # 64x patch inflation).
    zf_b = jnp.transpose(zf_cm.reshape(Cout, B, Pz), (1, 2, 0))   # (B, Pz, Cout)
    xf_b = jnp.transpose(xf_cm.reshape(Cout, B, Px), (1, 0, 2))   # (B, Cout, Px)

    # Stage 1: one MXU matmul per batch -> (Pz, Px) score matrix, lane-dense.
    s = pl.pallas_call(
        _xcorr_scores_kernel,
        out_shape=jax.ShapeDtypeStruct((B, Pz, Px), jnp.float32),
        grid=(B,),
        in_specs=[
            pl.BlockSpec((1, Pz, Cout), lambda bi: (bi, 0, 0)),
            pl.BlockSpec((1, Cout, Px), lambda bi: (bi, 0, 0)),
        ],
        out_specs=pl.BlockSpec((1, Pz, Px), lambda bi: (bi, 0, 0)),
        compiler_params=pltpu.CompilerParams(
            dimension_semantics=("parallel",)),
    )(zf_b, xf_b)

    s4 = s.reshape(B, Pz, Hx, Wx)   # row-major metadata reshape in XLA (no copy)

    # Stage 2: shifted-window accumulation + fused affine head.
    shift_sum = functools.partial(
        _shift_sum_kernel, hz=Hz, wz=Wz, ho=Ho, wo=Wo,
        out_scale=out_scale, out_bias=out_bias)
    resp = pl.pallas_call(
        shift_sum,
        out_shape=jax.ShapeDtypeStruct((B, Ho, Wo), jnp.float32),
        grid=(B,),
        in_specs=[pl.BlockSpec((1, Pz, Hx, Wx), lambda bi: (bi, 0, 0, 0))],
        out_specs=pl.BlockSpec((1, Ho, Wo), lambda bi: (bi, 0, 0)),
        compiler_params=pltpu.CompilerParams(
            dimension_semantics=("parallel",)),
    )(s4)
    return resp.reshape(B, 1, Ho, Wo)


@functools.partial(jax.jit, static_argnames=("out_scale", "out_bias"))
def _tracker_forward(z, x, w, b, *, out_scale, out_bias):
    B, _, Hz, Wz = z.shape
    _, _, Hx, Wx = x.shape
    Cout = w.shape[1]
    zf, xf = _shared_backbone(z, x, w, b)
    return _siamese_xcorr(zf, xf, B, Cout, Hz, Wz, Hx, Wx, out_scale, out_bias)


# ------------------------------ "module" ----------------------------------- #

class SiameseTrackerPallas:
    """Concrete Pallas implementation of the abstract SiameseTracker forward."""

    def __init__(self, cfg, key):
        self.cfg = cfg
        cin, cout = cfg["in_channels"], cfg["hidden_channels"]
        k1, k2 = jax.random.split(key)
        # deterministic synthetic parameters (no checkpoint load)
        self.w = jax.random.normal(k1, (cin, cout), jnp.float32) / jnp.sqrt(cin)
        self.b = jax.random.normal(k2, (cout,), jnp.float32) * 0.01
        self.out_scale = 1e-3
        self.out_bias = 0.0

    def forward(self, data):
        z, x = data["template"], data["search"]          # NCHW, like PyTorch
        return _tracker_forward(z, x, self.w, self.b,
                                out_scale=self.out_scale,
                                out_bias=self.out_bias)

    # TODO(synk): get_trainable_weights / compute_loss are abstract in the
    # reference module and have no forward-pass semantics to translate.


# ----------------------------- reference check ----------------------------- #

def _reference_forward(tracker, data):
    def backbone(x):
        y = jnp.einsum("bchw,co->bohw", x, tracker.w) + tracker.b[None, :, None, None]
        return jnp.maximum(y, 0.0)

    zf, xf = backbone(data["template"]), backbone(data["search"])
    B, C, Hz, Wz = zf.shape
    resp = jax.lax.conv_general_dilated(
        xf, zf.reshape(B, C, Hz, Wz),
        window_strides=(1, 1), padding="VALID",
        dimension_numbers=("NCHW", "OIHW", "NCHW"),
        feature_group_count=1,
    )
    # per-batch template: take the diagonal of the (B out-channels) result
    resp = jnp.stack([resp[b, b] for b in range(B)], axis=0)[:, None]
    return resp * tracker.out_scale + tracker.out_bias


# --------------------------------- main ------------------------------------ #

if __name__ == "__main__":
    key = jax.random.PRNGKey(0)
    k_param, k_z, k_x = jax.random.split(key, 3)

    cfg = {"in_channels": 4, "hidden_channels": 32}
    B, Cin = 2, cfg["in_channels"]
    Hz = Wz = 8      # template
    Hx = Wx = 16     # search

    template = jax.random.normal(k_z, (B, Cin, Hz, Wz), jnp.float32)
    search = jax.random.normal(k_x, (B, Cin, Hx, Wx), jnp.float32)
    data = {"template": template, "search": search}

    tracker = SiameseTrackerPallas(cfg, k_param)
    out = tracker.forward(data)
    out = jax.block_until_ready(out)

    ref = jax.block_until_ready(_reference_forward(tracker, data))
    assert out.shape == (B, 1, Hx - Hz + 1, Wx - Wz + 1)
    assert jnp.allclose(out, ref, rtol=1e-3, atol=1e-3)

    print("KERNEL_OK")
</pallas_src>

<mosaic_0001>
module attributes {stable_mosaic.version = 11 : i64} {
  func.func @_xcorr_scores_kernel(%arg0: i32, %arg1: memref<1x64x32xf32, #tpu.memory_space<vmem>>, %arg2: memref<1x32x256xf32, #tpu.memory_space<vmem>>, %arg3: memref<1x64x256xf32, #tpu.memory_space<vmem>>) attributes {dimension_semantics = [#tpu.dimension_semantics<parallel>], iteration_bounds = array<i64: 2>, scalar_prefetch = 0 : i64, scratch_operands = 0 : i64, tpu.core_type = #tpu.core_type<tc>, window_params = [{transform_indices = @transform_0, window_bounds = array<i64: 1, 64, 32>}, {transform_indices = @transform_1, window_bounds = array<i64: 1, 32, 256>}, {transform_indices = @transform_2, window_bounds = array<i64: 1, 64, 256>}]} {
    %c0 = arith.constant 0 : index
    %c0_0 = arith.constant 0 : index
    %c0_1 = arith.constant 0 : index
    %0 = vector.load %arg1[%c0, %c0_0, %c0_1] : memref<1x64x32xf32, #tpu.memory_space<vmem>>, vector<1x64x32xf32>
    %1 = vector.shape_cast %0 : vector<1x64x32xf32> to vector<64x32xf32>
    %c0_2 = arith.constant 0 : index
    %c0_3 = arith.constant 0 : index
    %c0_4 = arith.constant 0 : index
    %2 = vector.load %arg2[%c0_2, %c0_3, %c0_4] : memref<1x32x256xf32, #tpu.memory_space<vmem>>, vector<1x32x256xf32>
    %3 = vector.shape_cast %2 : vector<1x32x256xf32> to vector<32x256xf32>
    %cst = arith.constant dense<0.000000e+00> : vector<64x256xf32>
    %4 = tpu.matmul %1, %3, %cst {dimension_numbers = #tpu.dot_dimension_numbers<[1], [0], [0], [1], [0, 0, 1, 1], [], []>} : vector<64x32xf32>, vector<32x256xf32>, vector<64x256xf32> -> vector<64x256xf32>
    %c0_5 = arith.constant 0 : index
    %c0_6 = arith.constant 0 : index
    %c0_7 = arith.constant 0 : index
    %5 = vector.load %arg3[%c0_5, %c0_6, %c0_7] : memref<1x64x256xf32, #tpu.memory_space<vmem>>, vector<1x64x256xf32>
    %6 = vector.shape_cast %5 : vector<1x64x256xf32> to vector<64x256xf32>
    %7 = vector.shape_cast %4 : vector<64x256xf32> to vector<1x64x256xf32>
    tpu.vector_store %arg3[%c0_5, %c0_6, %c0_7], %7 {strides = array<i32>} : memref<1x64x256xf32, #tpu.memory_space<vmem>>, vector<1x64x256xf32>,
    return
  }
  func.func @transform_0(%arg0: i32) -> (i32, i32, i32) {
    %c0_i32 = arith.constant 0 : i32
    %c0_i32_0 = arith.constant 0 : i32
    %c0_i32_1 = arith.constant 0 : i32
    return %arg0, %c0_i32, %c0_i32_0 : i32, i32, i32
  }
  func.func @transform_1(%arg0: i32) -> (i32, i32, i32) {
    %c0_i32 = arith.constant 0 : i32
    %c0_i32_0 = arith.constant 0 : i32
    %c0_i32_1 = arith.constant 0 : i32
    return %arg0, %c0_i32, %c0_i32_0 : i32, i32, i32
  }
  func.func @transform_2(%arg0: i32) -> (i32, i32, i32) {
    %c0_i32 = arith.constant 0 : i32
    %c0_i32_0 = arith.constant 0 : i32
    %c0_i32_1 = arith.constant 0 : i32
    return %arg0, %c0_i32, %c0_i32_0 : i32, i32, i32
  }
}

module attributes {stable_mosaic.version = 11 : i64} {
  func.func @_backbone_kernel(%arg0: i32, %arg1: memref<4x128xf32, #tpu.memory_space<vmem>>, %arg2: memref<32x4xf32, #tpu.memory_space<vmem>>, %arg3: memref<32x1xf32, #tpu.memory_space<vmem>>, %arg4: memref<32x128xf32, #tpu.memory_space<vmem>>) attributes {dimension_semantics = [#tpu.dimension_semantics<parallel>], iteration_bounds = array<i64: 5>, scalar_prefetch = 0 : i64, scratch_operands = 0 : i64, tpu.core_type = #tpu.core_type<tc>, window_params = [{transform_indices = @transform_0, window_bounds = array<i64: 4, 128>}, {pipeline_mode = #tpu.pipeline_mode<synchronous>, transform_indices = @transform_1, window_bounds = array<i64: 32, 4>}, {pipeline_mode = #tpu.pipeline_mode<synchronous>, transform_indices = @transform_2, window_bounds = array<i64: 32, 1>}, {transform_indices = @transform_3, window_bounds = array<i64: 32, 128>}]} {
    %c0 = arith.constant 0 : index
    %c0_0 = arith.constant 0 : index
    %0 = vector.load %arg2[%c0, %c0_0] : memref<32x4xf32, #tpu.memory_space<vmem>>, vector<32x4xf32>
    %c0_1 = arith.constant 0 : index
    %c0_2 = arith.constant 0 : index
    %1 = vector.load %arg1[%c0_1, %c0_2] : memref<4x128xf32, #tpu.memory_space<vmem>>, vector<4x128xf32>
    %cst = arith.constant dense<0.000000e+00> : vector<32x128xf32>
    %2 = tpu.matmul %0, %1, %cst {dimension_numbers = #tpu.dot_dimension_numbers<[1], [0], [0], [1], [0, 0, 1, 1], [], []>} : vector<32x4xf32>, vector<4x128xf32>, vector<32x128xf32> -> vector<32x128xf32>
    %c0_3 = arith.constant 0 : index
    %c0_4 = arith.constant 0 : index
    %3 = vector.load %arg3[%c0_3, %c0_4] : memref<32x1xf32, #tpu.memory_space<vmem>>, vector<32x1xf32>
    %4 = vector.broadcast %3 : vector<32x1xf32> to vector<32x128xf32>
    %5 = arith.addf %2, %4 : vector<32x128xf32>
    %cst_5 = arith.constant 0.000000e+00 : f32
    %6 = vector.broadcast %cst_5 : f32 to vector<32x128xf32>
    %7 = arith.maximumf %5, %6 : vector<32x128xf32>
    %c0_6 = arith.constant 0 : index
    %c0_7 = arith.constant 0 : index
    %8 = vector.load %arg4[%c0_6, %c0_7] : memref<32x128xf32, #tpu.memory_space<vmem>>, vector<32x128xf32>
    tpu.vector_store %arg4[%c0_6, %c0_7], %7 {strides = array<i32>} : memref<32x128xf32, #tpu.memory_space<vmem>>, vector<32x128xf32>,
    return
  }
  func.func @transform_0(%arg0: i32) -> (i32, i32) {
    %c0_i32 = arith.constant 0 : i32
    %c0_i32_0 = arith.constant 0 : i32
    return %c0_i32, %arg0 : i32, i32
  }
  func.func @transform_1(%arg0: i32) -> (i32, i32) {
    %c0_i32 = arith.constant 0 : i32
    %c0_i32_0 = arith.constant 0 : i32
    %c0_i32_1 = arith.constant 0 : i32
    return %c0_i32, %c0_i32_0 : i32, i32
  }
  func.func @transform_2(%arg0: i32) -> (i32, i32) {
    %c0_i32 = arith.constant 0 : i32
    %c0_i32_0 = arith.constant 0 : i32
    %c0_i32_1 = arith.constant 0 : i32
    return %c0_i32, %c0_i32_0 : i32, i32
  }
  func.func @transform_3(%arg0: i32) -> (i32, i32) {
    %c0_i32 = arith.constant 0 : i32
    %c0_i32_0 = arith.constant 0 : i32
    return %c0_i32, %arg0 : i32, i32
  }
}

module attributes {stable_mosaic.version = 11 : i64} {
  func.func @_shift_sum_kernel(%arg0: i32, %arg1: memref<1x64x16x16xf32, #tpu.memory_space<vmem>>, %arg2: memref<1x9x9xf32, #tpu.memory_space<vmem>>) attributes {dimension_semantics = [#tpu.dimension_semantics<parallel>], iteration_bounds = array<i64: 2>, scalar_prefetch = 0 : i64, scratch_operands = 0 : i64, tpu.core_type = #tpu.core_type<tc>, window_params = [{transform_indices = @transform_0, window_bounds = array<i64: 1, 64, 16, 16>}, {transform_indices = @transform_1, window_bounds = array<i64: 1, 9, 9>}]} {
    %cst = arith.constant 0.000000e+00 : f32
    %0 = vector.broadcast %cst : f32 to vector<9x9xf32>
    %c0 = arith.constant 0 : index
    %c0_0 = arith.constant 0 : index
    %c0_1 = arith.constant 0 : index
    %c0_2 = arith.constant 0 : index
    %1 = vector.load %arg1[%c0, %c0_0, %c0_1, %c0_2] : memref<1x64x16x16xf32, #tpu.memory_space<vmem>>, vector<1x1x9x9xf32>
    %2 = vector.shape_cast %1 : vector<1x1x9x9xf32> to vector<9x9xf32>
    %3 = arith.addf %0, %2 : vector<9x9xf32>
    %c0_3 = arith.constant 0 : index
    %c1 = arith.constant 1 : index
    %c0_4 = arith.constant 0 : index
    %c1_5 = arith.constant 1 : index
    %4 = vector.load %arg1[%c0_3, %c1, %c0_4, %c1_5] : memref<1x64x16x16xf32, #tpu.memory_space<vmem>>, vector<1x1x9x9xf32>
    %5 = vector.shape_cast %4 : vector<1x1x9x9xf32> to vector<9x9xf32>
    %6 = arith.addf %3, %5 : vector<9x9xf32>
    %c0_6 = arith.constant 0 : index
    %c2 = arith.constant 2 : index
    %c0_7 = arith.constant 0 : index
    %c2_8 = arith.constant 2 : index
    %7 = vector.load %arg1[%c0_6, %c2, %c0_7, %c2_8] : memref<1x64x16x16xf32, #tpu.memory_space<vmem>>, vector<1x1x9x9xf32>
    %8 = vector.shape_cast %7 : vector<1x1x9x9xf32> to vector<9x9xf32>
    %9 = arith.addf %6, %8 : vector<9x9xf32>
    %c0_9 = arith.constant 0 : index
    %c3 = arith.constant 3 : index
    %c0_10 = arith.constant 0 : index
    %c3_11 = arith.constant 3 : index
    %10 = vector.load %arg1[%c0_9, %c3, %c0_10, %c3_11] : memref<1x64x16x16xf32, #tpu.memory_space<vmem>>, vector<1x1x9x9xf32>
    %11 = vector.shape_cast %10 : vector<1x1x9x9xf32> to vector<9x9xf32>
    %12 = arith.addf %9, %11 : vector<9x9xf32>
    %c0_12 = arith.constant 0 : index
    %c4 = arith.constant 4 : index
    %c0_13 = arith.constant 0 : index
    %c4_14 = arith.constant 4 : index
    %13 = vector.load %arg1[%c0_12, %c4, %c0_13, %c4_14] : memref<1x64x16x16xf32, #tpu.memory_space<vmem>>, vector<1x1x9x9xf32>
    %14 = vector.shape_cast %13 : vector<1x1x9x9xf32> to vector<9x9xf32>
    %15 = arith.addf %12, %14 : vector<9x9xf32>
    %c0_15 = arith.constant 0 : index
    %c5 = arith.constant 5 : index
    %c0_16 = arith.constant 0 : index
    %c5_17 = arith.constant 5 : index
    %16 = vector.load %arg1[%c0_15, %c5, %c0_16, %c5_17] : memref<1x64x16x16xf32, #tpu.memory_space<vmem>>, vector<1x1x9x9xf32>
    %17 = vector.shape_cast %16 : vector<1x1x9x9xf32> to vector<9x9xf32>
    %18 = arith.addf %15, %17 : vector<9x9xf32>
    %c0_18 = arith.constant 0 : index
    %c6 = arith.constant 6 : index
    %c0_19 = arith.constant 0 : index
    %c6_20 = arith.constant 6 : index
    %19 = vector.load %arg1[%c0_18, %c6, %c0_19, %c6_20] : memref<1x64x16x16xf32, #tpu.memory_space<vmem>>, vector<1x1x9x9xf32>
    %20 = vector.shape_cast %19 : vector<1x1x9x9xf32> to vector<9x9xf32>
    %21 = arith.addf %18, %20 : vector<9x9xf32>
    %c0_21 = arith.constant 0 : index
    %c7 = arith.constant 7 : index
    %c0_22 = arith.constant 0 : index
    %c7_23 = arith.constant 7 : index
    %22 = vector.load %arg1[%c0_21, %c7, %c0_22, %c7_23] : memref<1x64x16x16xf32, #tpu.memory_space<vmem>>, vector<1x1x9x9xf32>
    %23 = vector.shape_cast %22 : vector<1x1x9x9xf32> to vector<9x9xf32>
    %24 = arith.addf %21, %23 : vector<9x9xf32>
    %c0_24 = arith.constant 0 : index
    %c8 = arith.constant 8 : index
    %c1_25 = arith.constant 1 : index
    %c0_26 = arith.constant 0 : index
    %25 = vector.load %arg1[%c0_24, %c8, %c1_25, %c0_26] : memref<1x64x16x16xf32, #tpu.memory_space<vmem>>, vector<1x1x9x9xf32>
    %26 = vector.shape_cast %25 : vector<1x1x9x9xf32> to vector<9x9xf32>
    %27 = arith.addf %24, %26 : vector<9x9xf32>
    %c0_27 = arith.constant 0 : index
    %c9 = arith.constant 9 : index
    %c1_28 = arith.constant 1 : index
    %c1_29 = arith.constant 1 : index
    %28 = vector.load %arg1[%c0_27, %c9, %c1_28, %c1_29] : memref<1x64x16x16xf32, #tpu.memory_space<vmem>>, vector<1x1x9x9xf32>
    %29 = vector.shape_cast %28 : vector<1x1x9x9xf32> to vector<9x9xf32>
    %30 = arith.addf %27, %29 : vector<9x9xf32>
    %c0_30 = arith.constant 0 : index
    %c10 = arith.constant 10 : index
    %c1_31 = arith.constant 1 : index
    %c2_32 = arith.constant 2 : index
    %31 = vector.load %arg1[%c0_30, %c10, %c1_31, %c2_32] : memref<1x64x16x16xf32, #tpu.memory_space<vmem>>, vector<1x1x9x9xf32>
    %32 = vector.shape_cast %31 : vector<1x1x9x9xf32> to vector<9x9xf32>
    %33 = arith.addf %30, %32 : vector<9x9xf32>
    %c0_33 = arith.constant 0 : index
    %c11 = arith.constant 11 : index
    %c1_34 = arith.constant 1 : index
    %c3_35 = arith.constant 3 : index
    %34 = vector.load %arg1[%c0_33, %c11, %c1_34, %c3_35] : memref<1x64x16x16xf32, #tpu.memory_space<vmem>>, vector<1x1x9x9xf32>
    %35 = vector.shape_cast %34 : vector<1x1x9x9xf32> to vector<9x9xf32>
    %36 = arith.addf %33, %35 : vector<9x9xf32>
    %c0_36 = arith.constant 0 : index
    %c12 = arith.constant 12 : index
    %c1_37 = arith.constant 1 : index
    %c4_38 = arith.constant 4 : index
    %37 = vector.load %arg1[%c0_36, %c12, %c1_37, %c4_38] : memref<1x64x16x16xf32, #tpu.memory_space<vmem>>, vector<1x1x9x9xf32>
    %38 = vector.shape_cast %37 : vector<1x1x9x9xf32> to vector<9x9xf32>
    %39 = arith.addf %36, %38 : vector<9x9xf32>
    %c0_39 = arith.constant 0 : index
    %c13 = arith.constant 13 : index
    %c1_40 = arith.constant 1 : index
    %c5_41 = arith.constant 5 : index
    %40 = vector.load %arg1[%c0_39, %c13, %c1_40, %c5_41] : memref<1x64x16x16xf32, #tpu.memory_space<vmem>>, vector<1x1x9x9xf32>
    %41 = vector.shape_cast %40 : vector<1x1x9x9xf32> to vector<9x9xf32>
    %42 = arith.addf %39, %41 : vector<9x9xf32>
    %c0_42 = arith.constant 0 : index
    %c14 = arith.constant 14 : index
    %c1_43 = arith.constant 1 : index
    %c6_44 = arith.constant 6 : index
    %43 = vector.load %arg1[%c0_42, %c14, %c1_43, %c6_44] : memref<1x64x16x16xf32, #tpu.memory_space<vmem>>, vector<1x1x9x9xf32>
    %44 = vector.shape_cast %43 : vector<1x1x9x9xf32> to vector<9x9xf32>
    %45 = arith.addf %42, %44 : vector<9x9xf32>
    %c0_45 = arith.constant 0 : index
    %c15 = arith.constant 15 : index
    %c1_46 = arith.constant 1 : index
    %c7_47 = arith.constant 7 : index
    %46 = vector.load %arg1[%c0_45, %c15, %c1_46, %c7_47] : memref<1x64x16x16xf32, #tpu.memory_space<vmem>>, vector<1x1x9x9xf32>
    %47 = vector.shape_cast %46 : vector<1x1x9x9xf32> to vector<9x9xf32>
    %48 = arith.addf %45, %47 : vector<9x9xf32>
    %c0_48 = arith.constant 0 : index
    %c16 = arith.constant 16 : index
    %c2_49 = arith.constant 2 : index
    %c0_50 = arith.constant 0 : index
    %49 = vector.load %arg1[%c0_48, %c16, %c2_49, %c0_50] : memref<1x64x16x16xf32, #tpu.memory_space<vmem>>, vector<1x1x9x9xf32>
    %50 = vector.shape_cast %49 : vector<1x1x9x9xf32> to vector<9x9xf32>
    %51 = arith.addf %48, %50 : vector<9x9xf32>
    %c0_51 = arith.constant 0 : index
    %c17 = arith.constant 17 : index
    %c2_52 = arith.constant 2 : index
    %c1_53 = arith.constant 1 : index
    %52 = vector.load %arg1[%c0_51, %c17, %c2_52, %c1_53] : memref<1x64x16x16xf32, #tpu.memory_space<vmem>>, vector<1x1x9x9xf32>
    %53 = vector.shape_cast %52 : vector<1x1x9x9xf32> to vector<9x9xf32>
    %54 = arith.addf %51, %53 : vector<9x9xf32>
    %c0_54 = arith.constant 0 : index
    %c18 = arith.constant 18 : index
    %c2_55 = arith.constant 2 : index
    %c2_56 = arith.constant 2 : index
    %55 = vector.load %arg1[%c0_54, %c18, %c2_55, %c2_56] : memref<1x64x16x16xf32, #tpu.memory_space<vmem>>, vector<1x1x9x9xf32>
    %56 = vector.shape_cast %55 : vector<1x1x9x9xf32> to vector<9x9xf32>
    %57 = arith.addf %54, %56 : vector<9x9xf32>
    %c0_57 = arith.constant 0 : index
    %c19 = arith.constant 19 : index
    %c2_58 = arith.constant 2 : index
    %c3_59 = arith.constant 3 : index
    %58 = vector.load %arg1[%c0_57, %c19, %c2_58, %c3_59] : memref<1x64x16x16xf32, #tpu.memory_space<vmem>>, vector<1x1x9x9xf32>
    %59 = vector.shape_cast %58 : vector<1x1x9x9xf32> to vector<9x9xf32>
    %60 = arith.addf %57, %59 : vector<9x9xf32>
    %c0_60 = arith.constant 0 : index
    %c20 = arith.constant 20 : index
    %c2_61 = arith.constant 2 : index
    %c4_62 = arith.constant 4 : index
    %61 = vector.load %arg1[%c0_60, %c20, %c2_61, %c4_62] : memref<1x64x16x16xf32, #tpu.memory_space<vmem>>, vector<1x1x9x9xf32>
    %62 = vector.shape_cast %61 : vector<1x1x9x9xf32> to vector<9x9xf32>
    %63 = arith.addf %60, %62 : vector<9x9xf32>
    %c0_63 = arith.constant 0 : index
    %c21 = arith.constant 21 : index
    %c2_64 = arith.constant 2 : index
    %c5_65 = arith.constant 5 : index
    %64 = vector.load %arg1[%c0_63, %c21, %c2_64, %c5_65] : memref<1x64x16x16xf32, #tpu.memory_space<vmem>>, vector<1x1x9x9xf32>
    %65 = vector.shape_cast %64 : vector<1x1x9x9xf32> to vector<9x9xf32>
    %66 = arith.addf %63, %65 : vector<9x9xf32>
    %c0_66 = arith.constant 0 : index
    %c22 = arith.constant 22 : index
    %c2_67 = arith.constant 2 : index
    %c6_68 = arith.constant 6 : index
    %67 = vector.load %arg1[%c0_66, %c22, %c2_67, %c6_68] : memref<1x64x16x16xf32, #tpu.memory_space<vmem>>, vector<1x1x9x9xf32>
    %68 = vector.shape_cast %67 : vector<1x1x9x9xf32> to vector<9x9xf32>
    %69 = arith.addf %66, %68 : vector<9x9xf32>
    %c0_69 = arith.constant 0 : index
    %c23 = arith.constant 23 : index
    %c2_70 = arith.constant 2 : index
    %c7_71 = arith.constant 7 : index
    %70 = vector.load %arg1[%c0_69, %c23, %c2_70, %c7_71] : memref<1x64x16x16xf32, #tpu.memory_space<vmem>>, vector<1x1x9x9xf32>
    %71 = vector.shape_cast %70 : vector<1x1x9x9xf32> to vector<9x9xf32>
    %72 = arith.addf %69, %71 : vector<9x9xf32>
    %c0_72 = arith.constant 0 : index
    %c24 = arith.constant 24 : index
    %c3_73 = arith.constant 3 : index
    %c0_74 = arith.constant 0 : index
    %73 = vector.load %arg1[%c0_72, %c24, %c3_73, %c0_74] : memref<1x64x16x16xf32, #tpu.memory_space<vmem>>, vector<1x1x9x9xf32>
    %74 = vector.shape_cast %73 : vector<1x1x9x9xf32> to vector<9x9xf32>
    %75 = arith.addf %72, %74 : vector<9x9xf32>
    %c0_75 = arith.constant 0 : index
    %c25 = arith.constant 25 : index
    %c3_76 = arith.constant 3 : index
    %c1_77 = arith.constant 1 : index
    %76 = vector.load %arg1[%c0_75, %c25, %c3_76, %c1_77] : memref<1x64x16x16xf32, #tpu.memory_space<vmem>>, vector<1x1x9x9xf32>
    %77 = vector.shape_cast %76 : vector<1x1x9x9xf32> to vector<9x9xf32>
    %78 = arith.addf %75, %77 : vector<9x9xf32>
    %c0_78 = arith.constant 0 : index
    %c26 = arith.constant 26 : index
    %c3_79 = arith.constant 3 : index
    %c2_80 = arith.constant 2 : index
    %79 = vector.load %arg1[%c0_78, %c26, %c3_79, %c2_80] : memref<1x64x16x16xf32, #tpu.memory_space<vmem>>, vector<1x1x9x9xf32>
    %80 = vector.shape_cast %79 : vector<1x1x9x9xf32> to vector<9x9xf32>
    %81 = arith.addf %78, %80 : vector<9x9xf32>
    %c0_81 = arith.constant 0 : index
    %c27 = arith.constant 27 : index
    %c3_82 = arith.constant 3 : index
    %c3_83 = arith.constant 3 : index
    %82 = vector.load %arg1[%c0_81, %c27, %c3_82, %c3_83] : memref<1x64x16x16xf32, #tpu.memory_space<vmem>>, vector<1x1x9x9xf32>
    %83 = vector.shape_cast %82 : vector<1x1x9x9xf32> to vector<9x9xf32>
    %84 = arith.addf %81, %83 : vector<9x9xf32>
    %c0_84 = arith.constant 0 : index
    %c28 = arith.constant 28 : index
    %c3_85 = arith.constant 3 : index
    %c4_86 = arith.constant 4 : index
    %85 = vector.load %arg1[%c0_84, %c28, %c3_85, %c4_86] : memref<1x64x16x16xf32, #tpu.memory_space<vmem>>, vector<1x1x9x9xf32>
    %86 = vector.shape_cast %85 : vector<1x1x9x9xf32> to vector<9x9xf32>
    %87 = arith.addf %84, %86 : vector<9x9xf32>
    %c0_87 = arith.constant 0 : index
    %c29 = arith.constant 29 : index
    %c3_88 = arith.constant 3 : index
    %c5_89 = arith.constant 5 : index
    %88 = vector.load %arg1[%c0_87, %c29, %c3_88, %c5_89] : memref<1x64x16x16xf32, #tpu.memory_space<vmem>>, vector<1x1x9x9xf32>
    %89 = vector.shape_cast %88 : vector<1x1x9x9xf32> to vector<9x9xf32>
    %90 = arith.addf %87, %89 : vector<9x9xf32>
    %c0_90 = arith.constant 0 : index
    %c30 = arith.constant 30 : index
    %c3_91 = arith.constant 3 : index
    %c6_92 = arith.constant 6 : index
    %91 = vector.load %arg1[%c0_90, %c30, %c3_91, %c6_92] : memref<1x64x16x16xf32, #tpu.memory_space<vmem>>, vector<1x1x9x9xf32>
    %92 = vector.shape_cast %91 : vector<1x1x9x9xf32> to vector<9x9xf32>
    %93 = arith.addf %90, %92 : vector<9x9xf32>
    %c0_93 = arith.constant 0 : index
    %c31 = arith.constant 31 : index
    %c3_94 = arith.constant 3 : index
    %c7_95 = arith.constant 7 : index
    %94 = vector.load %arg1[%c0_93, %c31, %c3_94, %c7_95] : memref<1x64x16x16xf32, #tpu.memory_space<vmem>>, vector<1x1x9x9xf32>
    %95 = vector.shape_cast %94 : vector<1x1x9x9xf32> to vector<9x9xf32>
    %96 = arith.addf %93, %95 : vector<9x9xf32>
    %c0_96 = arith.constant 0 : index
    %c32 = arith.constant 32 : index
    %c4_97 = arith.constant 4 : index
    %c0_98 = arith.constant 0 : index
    %97 = vector.load %arg1[%c0_96, %c32, %c4_97, %c0_98] : memref<1x64x16x16xf32, #tpu.memory_space<vmem>>, vector<1x1x9x9xf32>
    %98 = vector.shape_cast %97 : vector<1x1x9x9xf32> to vector<9x9xf32>
    %99 = arith.addf %96, %98 : vector<9x9xf32>
    %c0_99 = arith.constant 0 : index
    %c33 = arith.constant 33 : index
    %c4_100 = arith.constant 4 : index
    %c1_101 = arith.constant 1 : index
    %100 = vector.load %arg1[%c0_99, %c33, %c4_100, %c1_101] : memref<1x64x16x16xf32, #tpu.memory_space<vmem>>, vector<1x1x9x9xf32>
    %101 = vector.shape_cast %100 : vector<1x1x9x9xf32> to vector<9x9xf32>
    %102 = arith.addf %99, %101 : vector<9x9xf32>
    %c0_102 = arith.constant 0 : index
    %c34 = arith.constant 34 : index
    %c4_103 = arith.constant 4 : index
    %c2_104 = arith.constant 2 : index
    %103 = vector.load %arg1[%c0_102, %c34, %c4_103, %c2_104] : memref<1x64x16x16xf32, #tpu.memory_space<vmem>>, vector<1x1x9x9xf32>
    %104 = vector.shape_cast %103 : vector<1x1x9x9xf32> to vector<9x9xf32>
    %105 = arith.addf %102, %104 : vector<9x9xf32>
    %c0_105 = arith.constant 0 : index
    %c35 = arith.constant 35 : index
    %c4_106 = arith.constant 4 : index
    %c3_107 = arith.constant 3 : index
    %106 = vector.load %arg1[%c0_105, %c35, %c4_106, %c3_107] : memref<1x64x16x16xf32, #tpu.memory_space<vmem>>, vector<1x1x9x9xf32>
    %107 = vector.shape_cast %106 : vector<1x1x9x9xf32> to vector<9x9xf32>
    %108 = arith.addf %105, %107 : vector<9x9xf32>
    %c0_108 = arith.constant 0 : index
    %c36 = arith.constant 36 : index
    %c4_109 = arith.constant 4 : index
    %c4_110 = arith.constant 4 : index
    %109 = vector.load %arg1[%c0_108, %c36, %c4_109, %c4_110] : memref<1x64x16x16xf32, #tpu.memory_space<vmem>>, vector<1x1x9x9xf32>
    %110 = vector.shape_cast %109 : vector<1x1x9x9xf32> to vector<9x9xf32>
    %111 = arith.addf %108, %110 : vector<9x9xf32>
    %c0_111 = arith.constant 0 : index
    %c37 = arith.constant 37 : index
    %c4_112 = arith.constant 4 : index
    %c5_113 = arith.constant 5 : index
    %112 = vector.load %arg1[%c0_111, %c37, %c4_112, %c5_113] : memref<1x64x16x16xf32, #tpu.memory_space<vmem>>, vector<1x1x9x9xf32>
    %113 = vector.shape_cast %112 : vector<1x1x9x9xf32> to vector<9x9xf32>
    %114 = arith.addf %111, %113 : vector<9x9xf32>
    %c0_114 = arith.constant 0 : index
    %c38 = arith.constant 38 : index
    %c4_115 = arith.constant 4 : index
    %c6_116 = arith.constant 6 : index
    %115 = vector.load %arg1[%c0_114, %c38, %c4_115, %c6_116] : memref<1x64x16x16xf32, #tpu.memory_space<vmem>>, vector<1x1x9x9xf32>
    %116 = vector.shape_cast %115 : vector<1x1x9x9xf32> to vector<9x9xf32>
    %117 = arith.addf %114, %116 : vector<9x9xf32>
    %c0_117 = arith.constant 0 : index
    %c39 = arith.constant 39 : index
    %c4_118 = arith.constant 4 : index
    %c7_119 = arith.constant 7 : index
    %118 = vector.load %arg1[%c0_117, %c39, %c4_118, %c7_119] : memref<1x64x16x16xf32, #tpu.memory_space<vmem>>, vector<1x1x9x9xf32>
    %119 = vector.shape_cast %118 : vector<1x1x9x9xf32> to vector<9x9xf32>
    %120 = arith.addf %117, %119 : vector<9x9xf32>
    %c0_120 = arith.constant 0 : index
    %c40 = arith.constant 40 : index
    %c5_121 = arith.constant 5 : index
    %c0_122 = arith.constant 0 : index
    %121 = vector.load %arg1[%c0_120, %c40, %c5_121, %c0_122] : memref<1x64x16x16xf32, #tpu.memory_space<vmem>>, vector<1x1x9x9xf32>
    %122 = vector.shape_cast %121 : vector<1x1x9x9xf32> to vector<9x9xf32>
    %123 = arith.addf %120, %122 : vector<9x9xf32>
    %c0_123 = arith.constant 0 : index
    %c41 = arith.constant 41 : index
    %c5_124 = arith.constant 5 : index
    %c1_125 = arith.constant 1 : index
    %124 = vector.load %arg1[%c0_123, %c41, %c5_124, %c1_125] : memref<1x64x16x16xf32, #tpu.memory_space<vmem>>, vector<1x1x9x9xf32>
    %125 = vector.shape_cast %124 : vector<1x1x9x9xf32> to vector<9x9xf32>
    %126 = arith.addf %123, %125 : vector<9x9xf32>
    %c0_126 = arith.constant 0 : index
    %c42 = arith.constant 42 : index
    %c5_127 = arith.constant 5 : index
    %c2_128 = arith.constant 2 : index
    %127 = vector.load %arg1[%c0_126, %c42, %c5_127, %c2_128] : memref<1x64x16x16xf32, #tpu.memory_space<vmem>>, vector<1x1x9x9xf32>
    %128 = vector.shape_cast %127 : vector<1x1x9x9xf32> to vector<9x9xf32>
    %129 = arith.addf %126, %128 : vector<9x9xf32>
    %c0_129 = arith.constant 0 : index
    %c43 = arith.constant 43 : index
    %c5_130 = arith.constant 5 : index
    %c3_131 = arith.constant 3 : index
    %130 = vector.load %arg1[%c0_129, %c43, %c5_130, %c3_131] : memref<1x64x16x16xf32, #tpu.memory_space<vmem>>, vector<1x1x9x9xf32>
    %131 = vector.shape_cast %130 : vector<1x1x9x9xf32> to vector<9x9xf32>
    %132 = arith.addf %129, %131 : vector<9x9xf32>
    %c0_132 = arith.constant 0 : index
    %c44 = arith.constant 44 : index
    %c5_133 = arith.constant 5 : index
    %c4_134 = arith.constant 4 : index
    %133 = vector.load %arg1[%c0_132, %c44, %c5_133, %c4_134] : memref<1x64x16x16xf32, #tpu.memory_space<vmem>>, vector<1x1x9x9xf32>
    %134 = vector.shape_cast %133 : vector<1x1x9x9xf32> to vector<9x9xf32>
    %135 = arith.addf %132, %134 : vector<9x9xf32>
    %c0_135 = arith.constant 0 : index
    %c45 = arith.constant 45 : index
    %c5_136 = arith.constant 5 : index
    %c5_137 = arith.constant 5 : index
    %136 = vector.load %arg1[%c0_135, %c45, %c5_136, %c5_137] : memref<1x64x16x16xf32, #tpu.memory_space<vmem>>, vector<1x1x9x9xf32>
    %137 = vector.shape_cast %136 : vector<1x1x9x9xf32> to vector<9x9xf32>
    %138 = arith.addf %135, %137 : vector<9x9xf32>
    %c0_138 = arith.constant 0 : index
    %c46 = arith.constant 46 : index
    %c5_139 = arith.constant 5 : index
    %c6_140 = arith.constant 6 : index
    %139 = vector.load %arg1[%c0_138, %c46, %c5_139, %c6_140] : memref<1x64x16x16xf32, #tpu.memory_space<vmem>>, vector<1x1x9x9xf32>
    %140 = vector.shape_cast %139 : vector<1x1x9x9xf32> to vector<9x9xf32>
    %141 = arith.addf %138, %140 : vector<9x9xf32>
    %c0_141 = arith.constant 0 : index
    %c47 = arith.constant 47 : index
    %c5_142 = arith.constant 5 : index
    %c7_143 = arith.constant 7 : index
    %142 = vector.load %arg1[%c0_141, %c47, %c5_142, %c7_143] : memref<1x64x16x16xf32, #tpu.memory_space<vmem>>, vector<1x1x9x9xf32>
    %143 = vector.shape_cast %142 : vector<1x1x9x9xf32> to vector<9x9xf32>
    %144 = arith.addf %141, %143 : vector<9x9xf32>
    %c0_144 = arith.constant 0 : index
    %c48 = arith.constant 48 : index
    %c6_145 = arith.constant 6 : index
    %c0_146 = arith.constant 0 : index
    %145 = vector.load %arg1[%c0_144, %c48, %c6_145, %c0_146] : memref<1x64x16x16xf32, #tpu.memory_space<vmem>>, vector<1x1x9x9xf32>
    %146 = vector.shape_cast %145 : vector<1x1x9x9xf32> to vector<9x9xf32>
    %147 = arith.addf %144, %146 : vector<9x9xf32>
    %c0_147 = arith.constant 0 : index
    %c49 = arith.constant 49 : index
    %c6_148 = arith.constant 6 : index
    %c1_149 = arith.constant 1 : index
    %148 = vector.load %arg1[%c0_147, %c49, %c6_148, %c1_149] : memref<1x64x16x16xf32, #tpu.memory_space<vmem>>, vector<1x1x9x9xf32>
    %149 = vector.shape_cast %148 : vector<1x1x9x9xf32> to vector<9x9xf32>
    %150 = arith.addf %147, %149 : vector<9x9xf32>
    %c0_150 = arith.constant 0 : index
    %c50 = arith.constant 50 : index
    %c6_151 = arith.constant 6 : index
    %c2_152 = arith.constant 2 : index
    %151 = vector.load %arg1[%c0_150, %c50, %c6_151, %c2_152] : memref<1x64x16x16xf32, #tpu.memory_space<vmem>>, vector<1x1x9x9xf32>
    %152 = vector.shape_cast %151 : vector<1x1x9x9xf32> to vector<9x9xf32>
    %153 = arith.addf %150, %152 : vector<9x9xf32>
    %c0_153 = arith.constant 0 : index
    %c51 = arith.constant 51 : index
    %c6_154 = arith.constant 6 : index
    %c3_155 = arith.constant 3 : index
    %154 = vector.load %arg1[%c0_153, %c51, %c6_154, %c3_155] : memref<1x64x16x16xf32, #tpu.memory_space<vmem>>, vector<1x1x9x9xf32>
    %155 = vector.shape_cast %154 : vector<1x1x9x9xf32> to vector<9x9xf32>
    %156 = arith.addf %153, %155 : vector<9x9xf32>
    %c0_156 = arith.constant 0 : index
    %c52 = arith.constant 52 : index
    %c6_157 = arith.constant 6 : index
    %c4_158 = arith.constant 4 : index
    %157 = vector.load %arg1[%c0_156, %c52, %c6_157, %c4_158] : memref<1x64x16x16xf32, #tpu.memory_space<vmem>>, vector<1x1x9x9xf32>
    %158 = vector.shape_cast %157 : vector<1x1x9x9xf32> to vector<9x9xf32>
    %159 = arith.addf %156, %158 : vector<9x9xf32>
    %c0_159 = arith.constant 0 : index
    %c53 = arith.constant 53 : index
    %c6_160 = arith.constant 6 : index
    %c5_161 = arith.constant 5 : index
    %160 = vector.load %arg1[%c0_159, %c53, %c6_160, %c5_161] : memref<1x64x16x16xf32, #tpu.memory_space<vmem>>, vector<1x1x9x9xf32>
    %161 = vector.shape_cast %160 : vector<1x1x9x9xf32> to vector<9x9xf32>
    %162 = arith.addf %159, %161 : vector<9x9xf32>
    %c0_162 = arith.constant 0 : index
    %c54 = arith.constant 54 : index
    %c6_163 = arith.constant 6 : index
    %c6_164 = arith.constant 6 : index
    %163 = vector.load %arg1[%c0_162, %c54, %c6_163, %c6_164] : memref<1x64x16x16xf32, #tpu.memory_space<vmem>>, vector<1x1x9x9xf32>
    %164 = vector.shape_cast %163 : vector<1x1x9x9xf32> to vector<9x9xf32>
    %165 = arith.addf %162, %164 : vector<9x9xf32>
    %c0_165 = arith.constant 0 : index
    %c55 = arith.constant 55 : index
    %c6_166 = arith.constant 6 : index
    %c7_167 = arith.constant 7 : index
    %166 = vector.load %arg1[%c0_165, %c55, %c6_166, %c7_167] : memref<1x64x16x16xf32, #tpu.memory_space<vmem>>, vector<1x1x9x9xf32>
    %167 = vector.shape_cast %166 : vector<1x1x9x9xf32> to vector<9x9xf32>
    %168 = arith.addf %165, %167 : vector<9x9xf32>
    %c0_168 = arith.constant 0 : index
    %c56 = arith.constant 56 : index
    %c7_169 = arith.constant 7 : index
    %c0_170 = arith.constant 0 : index
    %169 = vector.load %arg1[%c0_168, %c56, %c7_169, %c0_170] : memref<1x64x16x16xf32, #tpu.memory_space<vmem>>, vector<1x1x9x9xf32>
    %170 = vector.shape_cast %169 : vector<1x1x9x9xf32> to vector<9x9xf32>
    %171 = arith.addf %168, %170 : vector<9x9xf32>
    %c0_171 = arith.constant 0 : index
    %c57 = arith.constant 57 : index
    %c7_172 = arith.constant 7 : index
    %c1_173 = arith.constant 1 : index
    %172 = vector.load %arg1[%c0_171, %c57, %c7_172, %c1_173] : memref<1x64x16x16xf32, #tpu.memory_space<vmem>>, vector<1x1x9x9xf32>
    %173 = vector.shape_cast %172 : vector<1x1x9x9xf32> to vector<9x9xf32>
    %174 = arith.addf %171, %173 : vector<9x9xf32>
    %c0_174 = arith.constant 0 : index
    %c58 = arith.constant 58 : index
    %c7_175 = arith.constant 7 : index
    %c2_176 = arith.constant 2 : index
    %175 = vector.load %arg1[%c0_174, %c58, %c7_175, %c2_176] : memref<1x64x16x16xf32, #tpu.memory_space<vmem>>, vector<1x1x9x9xf32>
    %176 = vector.shape_cast %175 : vector<1x1x9x9xf32> to vector<9x9xf32>
    %177 = arith.addf %174, %176 : vector<9x9xf32>
    %c0_177 = arith.constant 0 : index
    %c59 = arith.constant 59 : index
    %c7_178 = arith.constant 7 : index
    %c3_179 = arith.constant 3 : index
    %178 = vector.load %arg1[%c0_177, %c59, %c7_178, %c3_179] : memref<1x64x16x16xf32, #tpu.memory_space<vmem>>, vector<1x1x9x9xf32>
    %179 = vector.shape_cast %178 : vector<1x1x9x9xf32> to vector<9x9xf32>
    %180 = arith.addf %177, %179 : vector<9x9xf32>
    %c0_180 = arith.constant 0 : index
    %c60 = arith.constant 60 : index
    %c7_181 = arith.constant 7 : index
    %c4_182 = arith.constant 4 : index
    %181 = vector.load %arg1[%c0_180, %c60, %c7_181, %c4_182] : memref<1x64x16x16xf32, #tpu.memory_space<vmem>>, vector<1x1x9x9xf32>
    %182 = vector.shape_cast %181 : vector<1x1x9x9xf32> to vector<9x9xf32>
    %183 = arith.addf %180, %182 : vector<9x9xf32>
    %c0_183 = arith.constant 0 : index
    %c61 = arith.constant 61 : index
    %c7_184 = arith.constant 7 : index
    %c5_185 = arith.constant 5 : index
    %184 = vector.load %arg1[%c0_183, %c61, %c7_184, %c5_185] : memref<1x64x16x16xf32, #tpu.memory_space<vmem>>, vector<1x1x9x9xf32>
    %185 = vector.shape_cast %184 : vector<1x1x9x9xf32> to vector<9x9xf32>
    %186 = arith.addf %183, %185 : vector<9x9xf32>
    %c0_186 = arith.constant 0 : index
    %c62 = arith.constant 62 : index
    %c7_187 = arith.constant 7 : index
    %c6_188 = arith.constant 6 : index
    %187 = vector.load %arg1[%c0_186, %c62, %c7_187, %c6_188] : memref<1x64x16x16xf32, #tpu.memory_space<vmem>>, vector<1x1x9x9xf32>
    %188 = vector.shape_cast %187 : vector<1x1x9x9xf32> to vector<9x9xf32>
    %189 = arith.addf %186, %188 : vector<9x9xf32>
    %c0_189 = arith.constant 0 : index
    %c63 = arith.constant 63 : index
    %c7_190 = arith.constant 7 : index
    %c7_191 = arith.constant 7 : index
    %190 = vector.load %arg1[%c0_189, %c63, %c7_190, %c7_191] : memref<1x64x16x16xf32, #tpu.memory_space<vmem>>, vector<1x1x9x9xf32>
    %191 = vector.shape_cast %190 : vector<1x1x9x9xf32> to vector<9x9xf32>
    %192 = arith.addf %189, %191 : vector<9x9xf32>
    %cst_192 = arith.constant 1.000000e-03 : f32
    %193 = vector.broadcast %cst_192 : f32 to vector<9x9xf32>
    %194 = arith.mulf %192, %193 : vector<9x9xf32>
    %cst_193 = arith.constant 0.000000e+00 : f32
    %195 = vector.broadcast %cst_193 : f32 to vector<9x9xf32>
    %196 = arith.addf %194, %195 : vector<9x9xf32>
    %c0_194 = arith.constant 0 : index
    %c0_195 = arith.constant 0 : index
    %c0_196 = arith.constant 0 : index
    %197 = vector.load %arg2[%c0_194, %c0_195, %c0_196] : memref<1x9x9xf32, #tpu.memory_space<vmem>>, vector<1x9x9xf32>
    %198 = vector.shape_cast %197 : vector<1x9x9xf32> to vector<9x9xf32>
    %199 = vector.shape_cast %196 : vector<9x9xf32> to vector<1x9x9xf32>
    tpu.vector_store %arg2[%c0_194, %c0_195, %c0_196], %199 {strides = array<i32>} : memref<1x9x9xf32, #tpu.memory_space<vmem>>, vector<1x9x9xf32>,
    return
  }
  func.func @transform_0(%arg0: i32) -> (i32, i32, i32, i32) {
    %c0_i32 = arith.constant 0 : i32
    %c0_i32_0 = arith.constant 0 : i32
    %c0_i32_1 = arith.constant 0 : i32
    %c0_i32_2 = arith.constant 0 : i32
    return %arg0, %c0_i32, %c0_i32_0, %c0_i32_1 : i32, i32, i32, i32
  }
  func.func @transform_1(%arg0: i32) -> (i32, i32, i32) {
    %c0_i32 = arith.constant 0 : i32
    %c0_i32_0 = arith.constant 0 : i32
    %c0_i32_1 = arith.constant 0 : i32
    return %arg0, %c0_i32, %c0_i32_0 : i32, i32, i32
  }
}

</mosaic_0001>

<llo_original>
// kernel: _tracker_forward.4
$region0: #{_tracker_forward.4}
  #allocation0 [shape = 'u32[]', space=smem, size = 0x4, offset = 0x4, fixed_abs, tag = 'smem constant byte address 0x4 - core index']
  #allocation1 [shape = 'u32[72,128]{1,0:T(1,128)}', space=vmem, size = 0x9000, scoped, tag = 'internal scratch']
  %s0 = inlined_call_operand.vmem [shape: f32[2,64,32], index: 0, kind: input, shape index: {}]
  %s1 = inlined_call_operand.vmem [shape: f32[2,32,256], index: 1, kind: input, shape index: {}]
  %s2 = inlined_call_operand.vmem [shape: f32[2,64,256], index: 2, kind: output, shape index: {}]
  %s3 = sld [smem:[#allocation0]]
  $region41: #{_tracker_forward.4} parent=0
    _
  %s5 = ssub.s32 1, %s3
  %s6 = scalar_select 0, %s5, %s3
  loop: start=0, step=1, limit=4
  $region2: #{_tracker_forward.4} parent=0 // loop_pre_header
    _
  $region3: #{_tracker_forward.4} parent=0 // loop_header
    %s8 = sphi 0, %s12
    %p9 = scmp.ge.s32.totalorder %s8, 4
    %s18 = sphi 0, %s20
    %s21 = sphi 0, %s18
    %s22 = sphi 0, %s21
    %s38 = sphi 0, %s22
    %s44 = sphi 0, %s46
    %s47 = sphi 0, %s44
    %s48 = sphi 0, %s47
    %s64 = sphi 0, %s48
    %s70 = sphi 0, %s72
    %s73 = sphi 0, %s70
    %s74 = sphi 0, %s73
    %s90 = sphi 0, %s74
  $region4: #{_tracker_forward.4} parent=0 // loop_header_branch
    %11 = sbr.rel (%p9) target = $region8
  $region5: #{_tracker_forward.4} parent=0 // loop_body
    %s13 = ssub.s32 %s8, 1
    %s14 = ssub.s32 %s8, 2
    %s15 = sadd.s32 %s8, 1
    %s16 = ssub.s32 %s8, %s15
    %p17 = scmp.eq.s32.totalorder %s16, 0
    %s19 = sadd.s32 %s18, 1
    %s20 = scalar_select %p17, %s18, %s19
    %p23 = pneg %p17
    %p24 = scmp.eq.s32.totalorder %s8, 1
    %p25 = por %p23, %p24
    %p26 = scmp.ne.s32.totalorder %s18, %s21
    %p27 = scmp.eq.s32.totalorder %s8, 0
    %p28 = por %p26, %p27
    %p29 = scmp.ne.s32.totalorder %s18, %s21
    %p30 = scmp.eq.s32.totalorder %s13, 1
    %p31 = por %p29, %p30
    %p32 = scmp.ne.s32.totalorder %s21, %s22
    %p33 = scmp.eq.s32.totalorder %s13, 0
    %p34 = por %p32, %p33
    %p35 = scmp.ne.s32.totalorder %s21, %s22
    %p36 = scmp.eq.s32.totalorder %s14, 1
    %p37 = por %p35, %p36
    %p39 = scmp.ne.s32.totalorder %s22, %s38
    %p40 = scmp.eq.s32.totalorder %s14, 0
    %p41 = por %p39, %p40
    %s42 = ssub.s32 %s8, %s15
    %p43 = scmp.eq.s32.totalorder %s42, 0
    %s45 = sadd.s32 %s44, 1
    %s46 = scalar_select %p43, %s44, %s45
    %p49 = pneg %p43
    %p50 = scmp.eq.s32.totalorder %s8, 1
    %p51 = por %p49, %p50
    %p52 = scmp.ne.s32.totalorder %s44, %s47
    %p53 = scmp.eq.s32.totalorder %s8, 0
    %p54 = por %p52, %p53
    %p55 = scmp.ne.s32.totalorder %s44, %s47
    %p56 = scmp.eq.s32.totalorder %s13, 1
    %p57 = por %p55, %p56
    %p58 = scmp.ne.s32.totalorder %s47, %s48
    %p59 = scmp.eq.s32.totalorder %s13, 0
    %p60 = por %p58, %p59
    %p61 = scmp.ne.s32.totalorder %s47, %s48
    %p62 = scmp.eq.s32.totalorder %s14, 1
    %p63 = por %p61, %p62
    %p65 = scmp.ne.s32.totalorder %s48, %s64
    %p66 = scmp.eq.s32.totalorder %s14, 0
    %p67 = por %p65, %p66
    %s68 = ssub.s32 %s8, %s15
    %p69 = scmp.eq.s32.totalorder %s68, 0
    %s71 = sadd.s32 %s70, 1
    %s72 = scalar_select %p69, %s70, %s71
    %p75 = pneg %p69
    %p76 = scmp.eq.s32.totalorder %s8, 1
    %p77 = por %p75, %p76
    %p78 = scmp.ne.s32.totalorder %s70, %s73
    %p79 = scmp.eq.s32.totalorder %s8, 0
    %p80 = por %p78, %p79
    %p81 = scmp.ne.s32.totalorder %s70, %s73
    %p82 = scmp.eq.s32.totalorder %s13, 1
    %p83 = por %p81, %p82
    %p84 = scmp.ne.s32.totalorder %s73, %s74
    %p85 = scmp.eq.s32.totalorder %s13, 0
    %p86 = por %p84, %p85
    %p87 = scmp.ne.s32.totalorder %s73, %s74
    %p88 = scmp.eq.s32.totalorder %s14, 1
    %p89 = por %p87, %p88
    %p91 = scmp.ne.s32.totalorder %s74, %s90
    %p92 = scmp.eq.s32.totalorder %s14, 0
    %p93 = por %p91, %p92
    %p94 = scmp.le.s32.totalorder 1, %s8
    %p95 = scmp.lt.s32.totalorder %s8, 3
    %p96 = pnand %p94, %p95
    %p97 = pneg %p96
    // Predicated region
    $region9: #{_tracker_forward.4} parent=5 // pred_check
      _
    $region10: #{_tracker_forward.4} parent=5 // pred_check_branch
      %99 = sbr.rel (%p96) target = $region12
    $region11: #{_tracker_forward.4} parent=5 // pred_region
      %s100 = ssub.s32 %s8, 1
    $region12: #{_tracker_forward.4} parent=5 // pred_fallthru
      _
    %p101 = scmp.lt.s32.totalorder %s8, 2
    // Predicated region
    $region13: #{_tracker_forward.4} parent=5 // pred_check
      %p102 = pneg %p101
    $region14: #{_tracker_forward.4} parent=5 // pred_check_branch
      %104 = sbr.rel (%p102) target = $region16
    $region15: #{_tracker_forward.4} parent=5 // pred_region
      // Predicated region
      $region17: #{_tracker_forward.4} parent=15 // pred_check
        %p105 = pneg %p28
      $region18: #{_tracker_forward.4} parent=15 // pred_check_branch
        %107 = sbr.rel (%p105) target = $region20
      $region19: #{_tracker_forward.4} parent=15 // pred_region
        %p108 = scmp.lt.s32.totalorder %s8, 1
        %s109 = scalar_select %p108, %s8, 1
        %s110 = smul.addr %s109, 8
        %s111 = smul.addr %s110, 8
        %s112 = scalar_lea.vmem %s0, %s111
      $region20: #{_tracker_forward.4} parent=15 // pred_fallthru
        _
      // Predicated region
      $region21: #{_tracker_forward.4} parent=15 // pred_check
        %p113 = pneg %p54
      $region22: #{_tracker_forward.4} parent=15 // pred_check_branch
        %115 = sbr.rel (%p113) target = $region24
      $region23: #{_tracker_forward.4} parent=15 // pred_region
        %p116 = scmp.lt.s32.totalorder %s8, 1
        %s117 = scalar_select %p116, %s8, 1
        %s118 = smul.addr %s117, 8
        %s119 = smul.addr %s118, 8
        %s120 = scalar_lea.vmem %s1, %s119
      $region24: #{_tracker_forward.4} parent=15 // pred_fallthru
        _
    $region16: #{_tracker_forward.4} parent=5 // pred_fallthru
      _
    %p121 = scmp.le.s32.totalorder 1, %s8
    %p122 = scmp.lt.s32.totalorder %s8, 3
    %p123 = pnand %p121, %p122
    %p124 = pneg %p123
    // Predicated region
    $region25: #{_tracker_forward.4} parent=5 // pred_check
      _
    $region26: #{_tracker_forward.4} parent=5 // pred_check_branch
      %126 = sbr.rel (%p123) target = $region28
    $region27: #{_tracker_forward.4} parent=5 // pred_region
      %s127 = ssub.s32 %s8, 1
      %p128 = scmp.lt.s32.totalorder %s13, 1
      %s129 = scalar_select %p128, %s13, 1
      %s130 = smul.addr %s129, 8
      %s131 = smul.addr %s130, 8
      %s132 = scalar_lea.vmem %s0, %s131
      %p133 = pneg %p34
      %p134 = pneg %p31
      %p135 = scmp.lt.s32.totalorder %s13, 1
      %s136 = scalar_select %p135, %s13, 1
      %s137 = smul.addr %s136, 8
      %s138 = smul.addr %s137, 8
      %s139 = scalar_lea.vmem %s1, %s138
      %p140 = pneg %p60
      %p141 = pneg %p57
      %p142 = pneg %p86
      %p143 = pneg %p83
      %p144 = scmp.lt.s32.totalorder %s13, 1
      %s145 = scalar_select %p144, %s13, 1
      %s146 = smul.addr %s145, 16
      %s147 = smul.addr %s146, 8
      %s148 = scalar_lea.vmem %s2, %s147
      %p149 = scmp.lt.s32.totalorder %s13, 1
      %s150 = scalar_select %p149, %s13, 1
      %s151 = smul.addr %s150, 8
      %s152 = smul.addr %s151, 8
      %s153 = scalar_lea.vmem %s0, %s152
      %p154 = scmp.lt.s32.totalorder %s13, 1
      %s155 = scalar_select %p154, %s13, 1
      %s156 = smul.addr %s155, 8
      %s157 = smul.addr %s156, 8
      %s158 = scalar_lea.vmem %s1, %s157
      %p159 = scmp.lt.s32.totalorder %s13, 1
      %s160 = scalar_select %p159, %s13, 1
      %s161 = smul.addr %s160, 16
      %s162 = smul.addr %s161, 8
      %s163 = scalar_lea.vmem %s2, %s162
      %v164 = vld [vmem:[%s153] sm:$0xff]
      %v165 = vld [vmem:[%s153 + $0x8] sm:$0xff]
      %v166 = vld [vmem:[%s153 + $0x10] sm:$0xff]
      %v167 = vld [vmem:[%s153 + $0x18] sm:$0xff]
      %v168 = vld [vmem:[%s153 + $0x20] sm:$0xff]
      %v169 = vld [vmem:[%s153 + $0x28] sm:$0xff]
      %v170 = vld [vmem:[%s153 + $0x30] sm:$0xff]
      %v171 = vld [vmem:[%s153 + $0x38] sm:$0xff]
      %v172 = vld [vmem:[%s158] sm:$0xff]
      %v173 = vld [vmem:[%s158 + $0x8] sm:$0xff]
      %v174 = vld [vmem:[%s158 + $0x10] sm:$0xff]
      %v175 = vld [vmem:[%s158 + $0x18] sm:$0xff]
      %v176 = vld [vmem:[%s158 + $0x20] sm:$0xff]
      %v177 = vld [vmem:[%s158 + $0x28] sm:$0xff]
      %v178 = vld [vmem:[%s158 + $0x30] sm:$0xff]
      %v179 = vld [vmem:[%s158 + $0x38] sm:$0xff]
      %vm180 = vcmask 261120
      %v182 = vsel %vm180, %v164, 0
      %v185 = vsel %vm180, %v165, 0
      %v188 = vsel %vm180, %v166, 0
      %v191 = vsel %vm180, %v167, 0
      %v194 = vsel %vm180, %v168, 0
      %v197 = vsel %vm180, %v169, 0
      %v200 = vsel %vm180, %v170, 0
      %v203 = vsel %vm180, %v171, 0
      %205 = vmatpush.msra.mxu0 0.0
      %206 = vmatpush.msra.mxu0 0.0
      %207 = vmatpush.msra.mxu0 0.0
      %208 = vmatpush.msra.mxu0 0.0
      %209 = vmatpush.msra.mxu0 0.0
      %210 = vmatpush.msra.mxu0 0.0
      %211 = vmatpush.msra.mxu0 0.0
      %212 = vmatpush.msra.mxu0 0.0
      %213 = vmatpush.msra.mxu0 0.0
      %214 = vmatpush.msra.mxu0 0.0
      %215 = vmatpush.msra.mxu0 0.0
      %216 = vmatpush.msra.mxu0 0.0
      %217 = vmatpush.msra.mxu0 %v178
      %218 = vmatpush.msra.mxu0 %v176
      %219 = vmatpush.msra.mxu0 %v174
      %220 = vmatpush.msra.mxu0 %v172
      %221 = vmatmul.f32.gmra.mxu0 %v182
      %v222 = vpop.f32.mrf.mxu0
      %v223 = vadd.f32 0.0, %v222
      %224 = vmatmul.f32.gmra.mxu0 %v185
      %v225 = vpop.f32.mrf.mxu0
      %v226 = vadd.f32 0.0, %v225
      %227 = vmatmul.f32.gmra.mxu0 %v188
      %v228 = vpop.f32.mrf.mxu0
      %v229 = vadd.f32 0.0, %v228
      %230 = vmatmul.f32.gmra.mxu0 %v191
      %v231 = vpop.f32.mrf.mxu0
      %v232 = vadd.f32 0.0, %v231
      %233 = vmatmul.f32.gmra.mxu0 %v194
      %v234 = vpop.f32.mrf.mxu0
      %v235 = vadd.f32 0.0, %v234
      %236 = vmatmul.f32.gmra.mxu0 %v197
      %v237 = vpop.f32.mrf.mxu0
      %v238 = vadd.f32 0.0, %v237
      %239 = vmatmul.f32.gmra.mxu0 %v200
      %v240 = vpop.f32.mrf.mxu0
      %v241 = vadd.f32 0.0, %v240
      %242 = vmatmul.f32.gmra.mxu0 %v203
      %v243 = vpop.f32.mrf.mxu0
      %v244 = vadd.f32 0.0, %v243
      %245 = vdwg.mxu0
      %246 = vmatpush.msra.mxu0 0.0
      %247 = vmatpush.msra.mxu0 0.0
      %248 = vmatpush.msra.mxu0 0.0
      %249 = vmatpush.msra.mxu0 0.0
      %250 = vmatpush.msra.mxu0 0.0
      %251 = vmatpush.msra.mxu0 0.0
      %252 = vmatpush.msra.mxu0 0.0
      %253 = vmatpush.msra.mxu0 0.0
      %254 = vmatpush.msra.mxu0 0.0
      %255 = vmatpush.msra.mxu0 0.0
      %256 = vmatpush.msra.mxu0 0.0
      %257 = vmatpush.msra.mxu0 0.0
      %258 = vmatpush.msra.mxu0 %v179
      %259 = vmatpush.msra.mxu0 %v177
      %260 = vmatpush.msra.mxu0 %v175
      %261 = vmatpush.msra.mxu0 %v173
      %262 = vmatmul.f32.gmra.mxu0 %v182
      %v263 = vpop.f32.mrf.mxu0
      %v264 = vadd.f32 0.0, %v263
      %265 = vmatmul.f32.gmra.mxu0 %v185
      %v266 = vpop.f32.mrf.mxu0
      %v267 = vadd.f32 0.0, %v266
      %268 = vmatmul.f32.gmra.mxu0 %v188
      %v269 = vpop.f32.mrf.mxu0
      %v270 = vadd.f32 0.0, %v269
      %271 = vmatmul.f32.gmra.mxu0 %v191
      %v272 = vpop.f32.mrf.mxu0
      %v273 = vadd.f32 0.0, %v272
      %274 = vmatmul.f32.gmra.mxu0 %v194
      %v275 = vpop.f32.mrf.mxu0
      %v276 = vadd.f32 0.0, %v275
      %277 = vmatmul.f32.gmra.mxu0 %v197
      %v278 = vpop.f32.mrf.mxu0
      %v279 = vadd.f32 0.0, %v278
      %280 = vmatmul.f32.gmra.mxu0 %v200
      %v281 = vpop.f32.mrf.mxu0
      %v282 = vadd.f32 0.0, %v281
      %283 = vmatmul.f32.gmra.mxu0 %v203
      %v284 = vpop.f32.mrf.mxu0
      %v285 = vadd.f32 0.0, %v284
      %286 = vdwg.mxu0
      %287 = vst [vmem:[%s163] sm:$0xff] %v223
      %288 = vst [vmem:[%s163 + $0x8] sm:$0xff] %v264
      %289 = vst [vmem:[%s163 + $0x10] sm:$0xff] %v226
      %290 = vst [vmem:[%s163 + $0x18] sm:$0xff] %v267
      %291 = vst [vmem:[%s163 + $0x20] sm:$0xff] %v229
      %292 = vst [vmem:[%s163 + $0x28] sm:$0xff] %v270
      %293 = vst [vmem:[%s163 + $0x30] sm:$0xff] %v232
      %294 = vst [vmem:[%s163 + $0x38] sm:$0xff] %v273
      %295 = vst [vmem:[%s163 + $0x40] sm:$0xff] %v235
      %296 = vst [vmem:[%s163 + $0x48] sm:$0xff] %v276
      %297 = vst [vmem:[%s163 + $0x50] sm:$0xff] %v238
      %298 = vst [vmem:[%s163 + $0x58] sm:$0xff] %v279
      %299 = vst [vmem:[%s163 + $0x60] sm:$0xff] %v241
      %300 = vst [vmem:[%s163 + $0x68] sm:$0xff] %v282
      %301 = vst [vmem:[%s163 + $0x70] sm:$0xff] %v244
      %302 = vst [vmem:[%s163 + $0x78] sm:$0xff] %v285
      %p303 = scmp.lt.s32.totalorder %s13, 1
      %s304 = scalar_select %p303, %s13, 1
      %s305 = smul.addr %s304, 16
      %s306 = smul.addr %s305, 8
      %s307 = scalar_lea.vmem %s2, %s306
      // Predicated region
      $region29: #{_tracker_forward.4} parent=27 // pred_check
        %p308 = pneg %p83
      $region30: #{_tracker_forward.4} parent=27 // pred_check_branch
        %310 = sbr.rel (%p308) target = $region32
      $region31: #{_tracker_forward.4} parent=27 // pred_region
        _
      $region32: #{_tracker_forward.4} parent=27 // pred_fallthru
        _
    $region28: #{_tracker_forward.4} parent=5 // pred_fallthru
      _
    %p311 = scmp.le.s32.totalorder 2, %s8
    // Predicated region
    $region33: #{_tracker_forward.4} parent=5 // pred_check
      %p312 = pneg %p311
    $region34: #{_tracker_forward.4} parent=5 // pred_check_branch
      %314 = sbr.rel (%p312) target = $region36
    $region35: #{_tracker_forward.4} parent=5 // pred_region
      %s315 = ssub.s32 %s8, 2
      // Predicated region
      $region37: #{_tracker_forward.4} parent=35 // pred_check
        %p316 = pneg %p89
      $region38: #{_tracker_forward.4} parent=35 // pred_check_branch
        %318 = sbr.rel (%p316) target = $region40
      $region39: #{_tracker_forward.4} parent=35 // pred_region
        %p319 = scmp.lt.s32.totalorder %s14, 1
        %s320 = scalar_select %p319, %s14, 1
        %s321 = smul.addr %s320, 16
        %s322 = smul.addr %s321, 8
        %s323 = scalar_lea.vmem %s2, %s322
      $region40: #{_tracker_forward.4} parent=35 // pred_fallthru
        _
    $region36: #{_tracker_forward.4} parent=5 // pred_fallthru
      _
  $region6: #{_tracker_forward.4} parent=0 // loop_footer
    %s12 = sadd.s32 1, %s8
  $region7: #{_tracker_forward.4} parent=0 // loop_footer_branch
    %7 = sbr.rel target = $region3
  $region8: #{_tracker_forward.4} parent=0 // loop_exit
    _

// kernel: _tracker_forward.3
$region0: #{_tracker_forward.3}
  #allocation0 [shape = 'u32[]', space=smem, size = 0x4, offset = 0x4, fixed_abs, tag = 'smem constant byte address 0x4 - core index']
  #allocation1 [shape = 'u32[72,128]{1,0:T(1,128)}', space=vmem, size = 0x9000, scoped, tag = 'internal scratch']
  %s0 = inlined_call_operand.vmem [shape: f32[4,640], index: 0, kind: input, shape index: {}]
  %s1 = inlined_call_operand.vmem [shape: f32[32,4], index: 1, kind: input, shape index: {}]
  %s2 = inlined_call_operand.vmem [shape: f32[32,1], index: 2, kind: input, shape index: {}]
  %s3 = inlined_call_operand.vmem [shape: f32[32,640], index: 3, kind: output, shape index: {}]
  %s4 = sld [smem:[#allocation0]]
  $region79: #{_tracker_forward.3} parent=0
    _
  %s6 = ssub.s32 1, %s4
  %s7 = scalar_select 0, %s6, %s4
  $region1: #{_tracker_forward.3} parent=0
    #allocation2 [shape = 'u8[32768]{0}', space=vmem, size = 0x8000, scoped, tag = 'output window, operand 0']
    loop: start=0, step=1, limit=7
    $region2: #{_tracker_forward.3} parent=1 // loop_pre_header
      _
    $region3: #{_tracker_forward.3} parent=1 // loop_header
      %s9 = sphi 0, %s13
      %p10 = scmp.ge.s32.totalorder %s9, 7
      %s19 = sphi 0, %s21
      %s22 = sphi 0, %s19
      %s23 = sphi 0, %s22
      %s39 = sphi 0, %s23
      %s43 = sphi 0, %s43
      %s45 = sphi 0, %s43
      %s46 = sphi 0, %s45
      %s60 = sphi 0, %s46
      %s64 = sphi 0, %s64
      %s66 = sphi 0, %s64
      %s67 = sphi 0, %s66
      %s81 = sphi 0, %s67
      %s87 = sphi 0, %s89
      %s90 = sphi 0, %s87
      %s91 = sphi 0, %s90
      %s107 = sphi 0, %s91
    $region4: #{_tracker_forward.3} parent=1 // loop_header_branch
      %12 = sbr.rel (%p10) target = $region8
    $region5: #{_tracker_forward.3} parent=1 // loop_body
      %s14 = ssub.s32 %s9, 1
      %s15 = ssub.s32 %s9, 2
      %s16 = sadd.s32 %s9, 1
      %s17 = ssub.s32 %s9, %s16
      %p18 = scmp.eq.s32.totalorder %s17, 0
      %s20 = sadd.s32 %s19, 1
      %s21 = scalar_select %p18, %s19, %s20
      %p24 = pneg %p18
      %p25 = scmp.eq.s32.totalorder %s9, 4
      %p26 = por %p24, %p25
      %p27 = scmp.ne.s32.totalorder %s19, %s22
      %p28 = scmp.eq.s32.totalorder %s9, 0
      %p29 = por %p27, %p28
      %p30 = scmp.ne.s32.totalorder %s19, %s22
      %p31 = scmp.eq.s32.totalorder %s14, 4
      %p32 = por %p30, %p31
      %p33 = scmp.ne.s32.totalorder %s22, %s23
      %p34 = scmp.eq.s32.totalorder %s14, 0
      %p35 = por %p33, %p34
      %p36 = scmp.ne.s32.totalorder %s22, %s23
      %p37 = scmp.eq.s32.totalorder %s15, 4
      %p38 = por %p36, %p37
      %p40 = scmp.ne.s32.totalorder %s23, %s39
      %p41 = scmp.eq.s32.totalorder %s15, 0
      %p42 = por %p40, %p41
      %s44 = sadd.s32 %s43, 1
      %p47 = scmp.eq.s32.totalorder %s9, 4
      %p48 = scmp.ne.s32.totalorder %s43, %s45
      %p49 = scmp.eq.s32.totalorder %s9, 0
      %p50 = por %p48, %p49
      %p51 = scmp.ne.s32.totalorder %s43, %s45
      %p52 = scmp.eq.s32.totalorder %s14, 4
      %p53 = por %p51, %p52
      %p54 = scmp.ne.s32.totalorder %s45, %s46
      %p55 = scmp.eq.s32.totalorder %s14, 0
      %p56 = por %p54, %p55
      %p57 = scmp.ne.s32.totalorder %s45, %s46
      %p58 = scmp.eq.s32.totalorder %s15, 4
      %p59 = por %p57, %p58
      %p61 = scmp.ne.s32.totalorder %s46, %s60
      %p62 = scmp.eq.s32.totalorder %s15, 0
      %p63 = por %p61, %p62
      %s65 = sadd.s32 %s64, 1
      %p68 = scmp.eq.s32.totalorder %s9, 4
      %p69 = scmp.ne.s32.totalorder %s64, %s66
      %p70 = scmp.eq.s32.totalorder %s9, 0
      %p71 = por %p69, %p70
      %p72 = scmp.ne.s32.totalorder %s64, %s66
      %p73 = scmp.eq.s32.totalorder %s14, 4
      %p74 = por %p72, %p73
      %p75 = scmp.ne.s32.totalorder %s66, %s67
      %p76 = scmp.eq.s32.totalorder %s14, 0
      %p77 = por %p75, %p76
      %p78 = scmp.ne.s32.totalorder %s66, %s67
      %p79 = scmp.eq.s32.totalorder %s15, 4
      %p80 = por %p78, %p79
      %p82 = scmp.ne.s32.totalorder %s67, %s81
      %p83 = scmp.eq.s32.totalorder %s15, 0
      %p84 = por %p82, %p83
      %s85 = ssub.s32 %s9, %s16
      %p86 = scmp.eq.s32.totalorder %s85, 0
      %s88 = sadd.s32 %s87, 1
      %s89 = scalar_select %p86, %s87, %s88
      %p92 = pneg %p86
      %p93 = scmp.eq.s32.totalorder %s9, 4
      %p94 = por %p92, %p93
      %p95 = scmp.ne.s32.totalorder %s87, %s90
      %p96 = scmp.eq.s32.totalorder %s9, 0
      %p97 = por %p95, %p96
      %p98 = scmp.ne.s32.totalorder %s87, %s90
      %p99 = scmp.eq.s32.totalorder %s14, 4
      %p100 = por %p98, %p99
      %p101 = scmp.ne.s32.totalorder %s90, %s91
      %p102 = scmp.eq.s32.totalorder %s14, 0
      %p103 = por %p101, %p102
      %p104 = scmp.ne.s32.totalorder %s90, %s91
      %p105 = scmp.eq.s32.totalorder %s15, 4
      %p106 = por %p104, %p105
      %p108 = scmp.ne.s32.totalorder %s91, %s107
      %p109 = scmp.eq.s32.totalorder %s15, 0
      %p110 = por %p108, %p109
      %p111 = scmp.le.s32.totalorder 1, %s9
      %p112 = scmp.lt.s32.totalorder %s9, 6
      %p113 = pnand %p111, %p112
      %p114 = pneg %p113
      // Predicated region
      $region9: #{_tracker_forward.3} parent=5 // pred_check
        _
      $region10: #{_tracker_forward.3} parent=5 // pred_check_branch
        %116 = sbr.rel (%p113) target = $region12
      $region11: #{_tracker_forward.3} parent=5 // pred_region
        %s117 = ssub.s32 %s9, 1
        // Predicated region
        $region13: #{_tracker_forward.3} parent=11 // pred_check
          %p118 = pneg %p56
        $region14: #{_tracker_forward.3} parent=11 // pred_check_branch
          %120 = sbr.rel (%p118) target = $region16
        $region15: #{_tracker_forward.3} parent=11 // pred_region
          _
        $region16: #{_tracker_forward.3} parent=11 // pred_fallthru
          _
        // Predicated region
        $region17: #{_tracker_forward.3} parent=11 // pred_check
          %p121 = pneg %p77
        $region18: #{_tracker_forward.3} parent=11 // pred_check_branch
          %123 = sbr.rel (%p121) target = $region20
        $region19: #{_tracker_forward.3} parent=11 // pred_region
          _
        $region20: #{_tracker_forward.3} parent=11 // pred_fallthru
          _
      $region12: #{_tracker_forward.3} parent=5 // pred_fallthru
        _
      %p124 = scmp.lt.s32.totalorder %s9, 5
      // Predicated region
      $region21: #{_tracker_forward.3} parent=5 // pred_check
        %p125 = pneg %p124
      $region22: #{_tracker_forward.3} parent=5 // pred_check_branch
        %127 = sbr.rel (%p125) target = $region24
      $region23: #{_tracker_forward.3} parent=5 // pred_region
        // Predicated region
        $region25: #{_tracker_forward.3} parent=23 // pred_check
          %p128 = pneg %p29
        $region26: #{_tracker_forward.3} parent=23 // pred_check_branch
          %130 = sbr.rel (%p128) target = $region28
        $region27: #{_tracker_forward.3} parent=23 // pred_region
          %p131 = scmp.lt.s32.totalorder %s9, 4
          %s132 = scalar_select %p131, %s9, 4
          %s133 = smul.addr %s132, 4
          %s134 = scalar_lea.vmem %s0, %s133
        $region28: #{_tracker_forward.3} parent=23 // pred_fallthru
          _
      $region24: #{_tracker_forward.3} parent=5 // pred_fallthru
        _
      %p135 = scmp.le.s32.totalorder 1, %s9
      %p136 = scmp.lt.s32.totalorder %s9, 6
      %p137 = pnand %p135, %p136
      %p138 = pneg %p137
      // Predicated region
      $region29: #{_tracker_forward.3} parent=5 // pred_check
        _
      $region30: #{_tracker_forward.3} parent=5 // pred_check_branch
        %140 = sbr.rel (%p137) target = $region32
      $region31: #{_tracker_forward.3} parent=5 // pred_region
        %s141 = ssub.s32 %s9, 1
        %p142 = scmp.lt.s32.totalorder %s14, 4
        %s143 = scalar_select %p142, %s14, 4
        %s144 = smul.addr %s143, 4
        %s145 = scalar_lea.vmem %s0, %s144
        %p146 = pneg %p35
        %p147 = pneg %p32
        %p148 = pneg %p56
        %p149 = pneg %p53
        %p150 = pneg %p77
        %p151 = pneg %p74
        %p152 = pneg %p103
        %p153 = pneg %p100
        %s154 = sand.u32 %s90, 1
        %s155 = sand.u32 %s90, 1
        %s156 = smul.addr %s155, 32
        %s157 = scalar_lea.vmem [#allocation2], %s156
        %p158 = scmp.lt.s32.totalorder %s14, 4
        %s159 = scalar_select %p158, %s14, 4
        %s160 = smul.addr %s159, 4
        %s161 = scalar_lea.vmem %s0, %s160
        %v162 = vld [vmem:[%s1] sm:$0xff]
        %v163 = vld [vmem:[%s1 + $0x8] sm:$0xff]
        %v164 = vld [vmem:[%s1 + $0x10] sm:$0xff]
        %v165 = vld [vmem:[%s1 + $0x18] sm:$0xff]
        %v166 = vld [vmem:[%s161] sm:$0xf]
        %v167 = vld [vmem:[%s2] sm:$0xff]
        %v168 = vld [vmem:[%s2 + $0x8] sm:$0xff]
        %v169 = vld [vmem:[%s2 + $0x10] sm:$0xff]
        %v170 = vld [vmem:[%s2 + $0x18] sm:$0xff]
        %172 = vset.pattern.permute.xlu0 0
        %173 = vperm.xlu0 %172, %v167
        %v174 = vpop.permute.xlu0 %173
        %177 = vset.pattern.permute.xlu0 0
        %178 = vperm.xlu0 %177, %v168
        %v179 = vpop.permute.xlu0 %178
        %182 = vset.pattern.permute.xlu0 0
        %183 = vperm.xlu0 %182, %v169
        %v184 = vpop.permute.xlu0 %183
        %187 = vset.pattern.permute.xlu0 0
        %188 = vperm.xlu0 %187, %v170
        %v189 = vpop.permute.xlu0 %188
        %vm191 = vcmask 31744
        %v193 = vsel %vm191, %v162, 0
        %v196 = vsel %vm191, %v163, 0
        %v199 = vsel %vm191, %v164, 0
        %v202 = vsel %vm191, %v165, 0
        %vm204 = vcmask 1043456
        %v206 = vsel %vm204, %v166, 0
        %208 = vmatpush.msra.mxu0 0.0
        %209 = vmatpush.msra.mxu0 0.0
        %210 = vmatpush.msra.mxu0 0.0
        %211 = vmatpush.msra.mxu0 0.0
        %212 = vmatpush.msra.mxu0 0.0
        %213 = vmatpush.msra.mxu0 0.0
        %214 = vmatpush.msra.mxu0 0.0
        %215 = vmatpush.msra.mxu0 0.0
        %216 = vmatpush.msra.mxu0 0.0
        %217 = vmatpush.msra.mxu0 0.0
        %218 = vmatpush.msra.mxu0 0.0
        %219 = vmatpush.msra.mxu0 0.0
        %220 = vmatpush.msra.mxu0 0.0
        %221 = vmatpush.msra.mxu0 0.0
        %222 = vmatpush.msra.mxu0 0.0
        %223 = vmatpush.msra.mxu0 %v206
        %224 = vmatmul.f32.gmra.mxu0 %v193
        %v225 = vpop.f32.mrf.mxu0
        %v226 = vadd.f32 %v174, %v225
        %227 = vmatmul.f32.gmra.mxu0 %v196
        %v228 = vpop.f32.mrf.mxu0
        %v229 = vadd.f32 %v179, %v228
        %230 = vmatmul.f32.gmra.mxu0 %v199
        %v231 = vpop.f32.mrf.mxu0
        %v232 = vadd.f32 %v184, %v231
        %233 = vmatmul.f32.gmra.mxu0 %v202
        %v234 = vpop.f32.mrf.mxu0
        %v235 = vadd.f32 %v189, %v234
        %236 = vdwg.mxu0
        %v237 = vmax.f32 %v226, 0.0
        %v238 = vmax.f32 %v229, 0.0
        %v239 = vmax.f32 %v232, 0.0
        %v240 = vmax.f32 %v235, 0.0
        %241 = vst [vmem:[%s157] sm:$0xff] %v237
        %242 = vst [vmem:[%s157 + $0x8] sm:$0xff] %v238
        %243 = vst [vmem:[%s157 + $0x10] sm:$0xff] %v239
        %244 = vst [vmem:[%s157 + $0x18] sm:$0xff] %v240
        %s245 = sand.u32 %s90, 1
        %s246 = sand.u32 %s90, 1
        %s247 = smul.addr %s246, 32
        %s248 = scalar_lea.vmem [#allocation2], %s247
        // Predicated region
        $region33: #{_tracker_forward.3} parent=31 // pred_check
          %p249 = pneg %p100
        $region34: #{_tracker_forward.3} parent=31 // pred_check_branch
          %251 = sbr.rel (%p249) target = $region36
        $region35: #{_tracker_forward.3} parent=31 // pred_region
          %s252 = smul.addr %s14, 8
          %s253 = scalar_lea.vmem %s3, %s252
          // Predicated region
          $region37: #{_tracker_forward.3} parent=35 // pred_check
            _
          $region38: #{_tracker_forward.3} parent=35 // pred_check_branch
            %255 = sbr.rel (0) target = $region40
          $region39: #{_tracker_forward.3} parent=35 // pred_region
            // Predicated region
            $region41: #{_tracker_forward.3} parent=39 // pred_check
              _
            $region42: #{_tracker_forward.3} parent=39 // pred_check_branch
              %257 = sbr.rel (0) target = $region44
            $region43: #{_tracker_forward.3} parent=39 // pred_region
              // Predicated region
              $region56: #{_tracker_forward.3} parent=43 // pred_check
                _
              $region57: #{_tracker_forward.3} parent=43 // pred_check_branch
                %279 = sbr.rel (0) target = $region59
              $region58: #{_tracker_forward.3} parent=43 // pred_region
                loop: start=0, step=1, limit=1
                $region60: #{_tracker_forward.3} parent=58 // loop_pre_header
                  _
                $region61: #{_tracker_forward.3} parent=58 // loop_header
                  %s281 = sphi 0, %s285
                  %p282 = scmp.ge.s32.totalorder %s281, 1
                  %s286 = sphi %s248, %s248
                  %s287 = sphi %s253, %s253
                $region62: #{_tracker_forward.3} parent=58 // loop_header_branch
                  %284 = sbr.rel (%p282) target = $region66
                $region63: #{_tracker_forward.3} parent=58 // loop_body
                  %v288 = vld [vmem:[%s286] sm:$0xff]
                  %289 = vst [vmem:[%s287] sm:$0xff] %v288
                  %v290 = vld [vmem:[%s286 + $0x8] sm:$0xff]
                  %291 = vst [vmem:[%s287 + $0x28] sm:$0xff] %v290
                  %v292 = vld [vmem:[%s286 + $0x10] sm:$0xff]
                  %293 = vst [vmem:[%s287 + $0x50] sm:$0xff] %v292
                  %v294 = vld [vmem:[%s286 + $0x18] sm:$0xff]
                  %295 = vst [vmem:[%s287 + $0x78] sm:$0xff] %v294
                $region64: #{_tracker_forward.3} parent=58 // loop_footer
                  %s285 = sadd.s32 1, %s281
                $region65: #{_tracker_forward.3} parent=58 // loop_footer_branch
                  %280 = sbr.rel target = $region61
                $region66: #{_tracker_forward.3} parent=58 // loop_exit
                  _
              $region59: #{_tracker_forward.3} parent=43 // pred_fallthru
                _
              // Predicated region
              $region67: #{_tracker_forward.3} parent=43 // pred_check
                _
              $region68: #{_tracker_forward.3} parent=43 // pred_check_branch
                %297 = sbr.rel target = $region70
              $region69: #{_tracker_forward.3} parent=43 // pred_region
                _
              $region70: #{_tracker_forward.3} parent=43 // pred_fallthru
                _
            $region44: #{_tracker_forward.3} parent=39 // pred_fallthru
              _
            // Predicated region
            $region45: #{_tracker_forward.3} parent=39 // pred_check
              _
            $region46: #{_tracker_forward.3} parent=39 // pred_check_branch
              %259 = sbr.rel target = $region48
            $region47: #{_tracker_forward.3} parent=39 // pred_region
              %s261 = ssub.s32 256, 1
              loop: start=0, step=1, limit=1
              $region49: #{_tracker_forward.3} parent=47 // loop_pre_header
                _
              $region50: #{_tracker_forward.3} parent=47 // loop_header
                %s263 = sphi 0, %s267
                %p264 = scmp.ge.s32.totalorder %s263, 1
                %s268 = sphi %s248, %s248
                %s269 = sphi %s253, %s253
              $region51: #{_tracker_forward.3} parent=47 // loop_header_branch
                %266 = sbr.rel (%p264) target = $region55
              $region52: #{_tracker_forward.3} parent=47 // loop_body
                %v270 = vld [vmem:[%s268] sm:%s261]
                %271 = vst [vmem:[%s269] sm:%s261] %v270
                %v272 = vld [vmem:[%s268 + $0x8] sm:%s261]
                %273 = vst [vmem:[%s269 + $0x28] sm:%s261] %v272
                %v274 = vld [vmem:[%s268 + $0x10] sm:%s261]
                %275 = vst [vmem:[%s269 + $0x50] sm:%s261] %v274
                %v276 = vld [vmem:[%s268 + $0x18] sm:%s261]
                %277 = vst [vmem:[%s269 + $0x78] sm:%s261] %v276
              $region53: #{_tracker_forward.3} parent=47 // loop_footer
                %s267 = sadd.s32 1, %s263
              $region54: #{_tracker_forward.3} parent=47 // loop_footer_branch
                %262 = sbr.rel target = $region50
              $region55: #{_tracker_forward.3} parent=47 // loop_exit
                _
            $region48: #{_tracker_forward.3} parent=39 // pred_fallthru
              _
          $region40: #{_tracker_forward.3} parent=35 // pred_fallthru
            _
          %298 = vnop
        $region36: #{_tracker_forward.3} parent=31 // pred_fallthru
          _
      $region32: #{_tracker_forward.3} parent=5 // pred_fallthru
        _
      %p299 = scmp.le.s32.totalorder 2, %s9
      // Predicated region
      $region71: #{_tracker_forward.3} parent=5 // pred_check
        %p300 = pneg %p299
      $region72: #{_tracker_forward.3} parent=5 // pred_check_branch
        %302 = sbr.rel (%p300) target = $region74
      $region73: #{_tracker_forward.3} parent=5 // pred_region
        %s303 = ssub.s32 %s9, 2
        // Predicated region
        $region75: #{_tracker_forward.3} parent=73 // pred_check
          %p304 = pneg %p106
        $region76: #{_tracker_forward.3} parent=73 // pred_check_branch
          %306 = sbr.rel (%p304) target = $region78
        $region77: #{_tracker_forward.3} parent=73 // pred_region
          %s307 = sand.u32 %s91, 1
          %s308 = sand.u32 %s91, 1
          %s309 = smul.addr %s308, 32
          %s310 = scalar_lea.vmem [#allocation2], %s309
        $region78: #{_tracker_forward.3} parent=73 // pred_fallthru
          _
      $region74: #{_tracker_forward.3} parent=5 // pred_fallthru
        _
    $region6: #{_tracker_forward.3} parent=1 // loop_footer
      %s13 = sadd.s32 1, %s9
    $region7: #{_tracker_forward.3} parent=1 // loop_footer_branch
      %8 = sbr.rel target = $region3
    $region8: #{_tracker_forward.3} parent=1 // loop_exit
      _

// kernel: _tracker_forward.5
$region0: #{_tracker_forward.5}
  #allocation0 [shape = 'u32[]', space=smem, size = 0x4, offset = 0x4, fixed_abs, tag = 'smem constant byte address 0x4 - core index']
  #allocation1 [shape = 'u32[72,128]{1,0:T(1,128)}', space=vmem, size = 0x9000, scoped, tag = 'internal scratch']
  %s0 = inlined_call_operand.vmem [shape: f32[2,64,16,16], index: 0, kind: input, shape index: {}]
  %s1 = inlined_call_operand.vmem [shape: f32[2,9,9], index: 1, kind: output, shape index: {}]
  %s2 = sld [smem:[#allocation0]]
  $region37: #{_tracker_forward.5} parent=0
    _
  %s4 = ssub.s32 1, %s2
  %s5 = scalar_select 0, %s4, %s2
  loop: start=0, step=1, limit=4
  $region2: #{_tracker_forward.5} parent=0 // loop_pre_header
    _
  $region3: #{_tracker_forward.5} parent=0 // loop_header
    %s7 = sphi 0, %s11
    %p8 = scmp.ge.s32.totalorder %s7, 4
    %s17 = sphi 0, %s19
    %s20 = sphi 0, %s17
    %s21 = sphi 0, %s20
    %s37 = sphi 0, %s21
    %s43 = sphi 0, %s45
    %s46 = sphi 0, %s43
    %s47 = sphi 0, %s46
    %s63 = sphi 0, %s47
  $region4: #{_tracker_forward.5} parent=0 // loop_header_branch
    %10 = sbr.rel (%p8) target = $region8
  $region5: #{_tracker_forward.5} parent=0 // loop_body
    %s12 = ssub.s32 %s7, 1
    %s13 = ssub.s32 %s7, 2
    %s14 = sadd.s32 %s7, 1
    %s15 = ssub.s32 %s7, %s14
    %p16 = scmp.eq.s32.totalorder %s15, 0
    %s18 = sadd.s32 %s17, 1
    %s19 = scalar_select %p16, %s17, %s18
    %p22 = pneg %p16
    %p23 = scmp.eq.s32.totalorder %s7, 1
    %p24 = por %p22, %p23
    %p25 = scmp.ne.s32.totalorder %s17, %s20
    %p26 = scmp.eq.s32.totalorder %s7, 0
    %p27 = por %p25, %p26
    %p28 = scmp.ne.s32.totalorder %s17, %s20
    %p29 = scmp.eq.s32.totalorder %s12, 1
    %p30 = por %p28, %p29
    %p31 = scmp.ne.s32.totalorder %s20, %s21
    %p32 = scmp.eq.s32.totalorder %s12, 0
    %p33 = por %p31, %p32
    %p34 = scmp.ne.s32.totalorder %s20, %s21
    %p35 = scmp.eq.s32.totalorder %s13, 1
    %p36 = por %p34, %p35
    %p38 = scmp.ne.s32.totalorder %s21, %s37
    %p39 = scmp.eq.s32.totalorder %s13, 0
    %p40 = por %p38, %p39
    %s41 = ssub.s32 %s7, %s14
    %p42 = scmp.eq.s32.totalorder %s41, 0
    %s44 = sadd.s32 %s43, 1
    %s45 = scalar_select %p42, %s43, %s44
    %p48 = pneg %p42
    %p49 = scmp.eq.s32.totalorder %s7, 1
    %p50 = por %p48, %p49
    %p51 = scmp.ne.s32.totalorder %s43, %s46
    %p52 = scmp.eq.s32.totalorder %s7, 0
    %p53 = por %p51, %p52
    %p54 = scmp.ne.s32.totalorder %s43, %s46
    %p55 = scmp.eq.s32.totalorder %s12, 1
    %p56 = por %p54, %p55
    %p57 = scmp.ne.s32.totalorder %s46, %s47
    %p58 = scmp.eq.s32.totalorder %s12, 0
    %p59 = por %p57, %p58
    %p60 = scmp.ne.s32.totalorder %s46, %s47
    %p61 = scmp.eq.s32.totalorder %s13, 1
    %p62 = por %p60, %p61
    %p64 = scmp.ne.s32.totalorder %s47, %s63
    %p65 = scmp.eq.s32.totalorder %s13, 0
    %p66 = por %p64, %p65
    %p67 = scmp.le.s32.totalorder 1, %s7
    %p68 = scmp.lt.s32.totalorder %s7, 3
    %p69 = pnand %p67, %p68
    %p70 = pneg %p69
    // Predicated region
    $region9: #{_tracker_forward.5} parent=5 // pred_check
      _
    $region10: #{_tracker_forward.5} parent=5 // pred_check_branch
      %72 = sbr.rel (%p69) target = $region12
    $region11: #{_tracker_forward.5} parent=5 // pred_region
      %s73 = ssub.s32 %s7, 1
    $region12: #{_tracker_forward.5} parent=5 // pred_fallthru
      _
    %p74 = scmp.lt.s32.totalorder %s7, 2
    // Predicated region
    $region13: #{_tracker_forward.5} parent=5 // pred_check
      %p75 = pneg %p74
    $region14: #{_tracker_forward.5} parent=5 // pred_check_branch
      %77 = sbr.rel (%p75) target = $region16
    $region15: #{_tracker_forward.5} parent=5 // pred_region
      // Predicated region
      $region17: #{_tracker_forward.5} parent=15 // pred_check
        %p78 = pneg %p27
      $region18: #{_tracker_forward.5} parent=15 // pred_check_branch
        %80 = sbr.rel (%p78) target = $region20
      $region19: #{_tracker_forward.5} parent=15 // pred_region
        %p81 = scmp.lt.s32.totalorder %s7, 1
        %s82 = scalar_select %p81, %s7, 1
        %s83 = smul.addr %s82, 128
        %s84 = smul.addr %s83, 8
        %s85 = scalar_lea.vmem %s0, %s84
      $region20: #{_tracker_forward.5} parent=15 // pred_fallthru
        _
    $region16: #{_tracker_forward.5} parent=5 // pred_fallthru
      _
    %p86 = scmp.le.s32.totalorder 1, %s7
    %p87 = scmp.lt.s32.totalorder %s7, 3
    %p88 = pnand %p86, %p87
    %p89 = pneg %p88
    // Predicated region
    $region21: #{_tracker_forward.5} parent=5 // pred_check
      _
    $region22: #{_tracker_forward.5} parent=5 // pred_check_branch
      %91 = sbr.rel (%p88) target = $region24
    $region23: #{_tracker_forward.5} parent=5 // pred_region
      %s92 = ssub.s32 %s7, 1
      %p93 = scmp.lt.s32.totalorder %s12, 1
      %s94 = scalar_select %p93, %s12, 1
      %s95 = smul.addr %s94, 128
      %s96 = smul.addr %s95, 8
      %s97 = scalar_lea.vmem %s0, %s96
      %p98 = pneg %p33
      %p99 = pneg %p30
      %p100 = pneg %p59
      %p101 = pneg %p56
      %p102 = scmp.lt.s32.totalorder %s12, 1
      %s103 = scalar_select %p102, %s12, 1
      %s104 = smul.addr %s103, 2
      %s105 = smul.addr %s104, 8
      %s106 = scalar_lea.vmem %s1, %s105
      %p107 = scmp.lt.s32.totalorder %s12, 1
      %s108 = scalar_select %p107, %s12, 1
      %s109 = smul.addr %s108, 128
      %s110 = smul.addr %s109, 8
      %s111 = scalar_lea.vmem %s0, %s110
      %p112 = scmp.lt.s32.totalorder %s12, 1
      %s113 = scalar_select %p112, %s12, 1
      %s114 = smul.addr %s113, 2
      %s115 = smul.addr %s114, 8
      %s116 = scalar_lea.vmem %s1, %s115
      %v117 = vld [vmem:[%s111] sm:$0xff]
      %v118 = vld [vmem:[%s111 + $0x8] sm:$0x1]
      %v119 = vadd.f32 %v117, 0.0
      %v120 = vadd.f32 %v118, 0.0
      %s121 = scalar_lea.vmem %s111, 16
      %v122 = vld [vmem:[%s121] sm:$0xff]
      %v123 = vld [vmem:[%s121 + $0x8] sm:$0x1]
      %126 = vrot.lane.b32.xlu0 %v122, 127
      %v127 = vpop.permute.xlu0 %126
      %128 = vrot.lane.b32.xlu0 %v123, 127
      %v129 = vpop.permute.xlu0 %128
      %v132 = vadd.f32 %v119, %v127
      %v133 = vadd.f32 %v120, %v129
      %s134 = scalar_lea.vmem %s111, 32
      %v135 = vld [vmem:[%s134] sm:$0xff]
      %v136 = vld [vmem:[%s134 + $0x8] sm:$0x1]
      %139 = vrot.lane.b32.xlu0 %v135, 126
      %v140 = vpop.permute.xlu0 %139
      %141 = vrot.lane.b32.xlu0 %v136, 126
      %v142 = vpop.permute.xlu0 %141
      %v145 = vadd.f32 %v132, %v140
      %v146 = vadd.f32 %v133, %v142
      %s147 = scalar_lea.vmem %s111, 48
      %v148 = vld [vmem:[%s147] sm:$0xff]
      %v149 = vld [vmem:[%s147 + $0x8] sm:$0x1]
      %152 = vrot.lane.b32.xlu0 %v148, 125
      %v153 = vpop.permute.xlu0 %152
      %154 = vrot.lane.b32.xlu0 %v149, 125
      %v155 = vpop.permute.xlu0 %154
      %v158 = vadd.f32 %v145, %v153
      %v159 = vadd.f32 %v146, %v155
      %s160 = scalar_lea.vmem %s111, 64
      %v161 = vld [vmem:[%s160] sm:$0xff]
      %v162 = vld [vmem:[%s160 + $0x8] sm:$0x1]
      %165 = vrot.lane.b32.xlu0 %v161, 124
      %v166 = vpop.permute.xlu0 %165
      %167 = vrot.lane.b32.xlu0 %v162, 124
      %v168 = vpop.permute.xlu0 %167
      %v171 = vadd.f32 %v158, %v166
      %v172 = vadd.f32 %v159, %v168
      %s173 = scalar_lea.vmem %s111, 80
      %v174 = vld [vmem:[%s173] sm:$0xff]
      %v175 = vld [vmem:[%s173 + $0x8] sm:$0x1]
      %178 = vrot.lane.b32.xlu0 %v174, 123
      %v179 = vpop.permute.xlu0 %178
      %180 = vrot.lane.b32.xlu0 %v175, 123
      %v181 = vpop.permute.xlu0 %180
      %v184 = vadd.f32 %v171, %v179
      %v185 = vadd.f32 %v172, %v181
      %s186 = scalar_lea.vmem %s111, 96
      %v187 = vld [vmem:[%s186] sm:$0xff]
      %v188 = vld [vmem:[%s186 + $0x8] sm:$0x1]
      %191 = vrot.lane.b32.xlu0 %v187, 122
      %v192 = vpop.permute.xlu0 %191
      %193 = vrot.lane.b32.xlu0 %v188, 122
      %v194 = vpop.permute.xlu0 %193
      %v197 = vadd.f32 %v184, %v192
      %v198 = vadd.f32 %v185, %v194
      %s199 = scalar_lea.vmem %s111, 112
      %v200 = vld [vmem:[%s199] sm:$0xff]
      %v201 = vld [vmem:[%s199 + $0x8] sm:$0x1]
      %204 = vrot.lane.b32.xlu0 %v200, 121
      %v205 = vpop.permute.xlu0 %204
      %206 = vrot.lane.b32.xlu0 %v201, 121
      %v207 = vpop.permute.xlu0 %206
      %v210 = vadd.f32 %v197, %v205
      %v211 = vadd.f32 %v198, %v207
      %s212 = scalar_lea.vmem %s111, 128
      %v213 = vld [vmem:[%s212 + $0x1] sm:$0xff]
      %v214 = vld [vmem:[%s212 + $0x9] sm:$0x1]
      %v215 = vadd.f32 %v210, %v213
      %v216 = vadd.f32 %v211, %v214
      %s217 = scalar_lea.vmem %s111, 144
      %v218 = vld [vmem:[%s217 + $0x1] sm:$0xff]
      %v219 = vld [vmem:[%s217 + $0x9] sm:$0x1]
      %222 = vrot.lane.b32.xlu0 %v218, 127
      %v223 = vpop.permute.xlu0 %222
      %224 = vrot.lane.b32.xlu0 %v219, 127
      %v225 = vpop.permute.xlu0 %224
      %v228 = vadd.f32 %v215, %v223
      %v229 = vadd.f32 %v216, %v225
      %s230 = scalar_lea.vmem %s111, 160
      %v231 = vld [vmem:[%s230 + $0x1] sm:$0xff]
      %v232 = vld [vmem:[%s230 + $0x9] sm:$0x1]
      %235 = vrot.lane.b32.xlu0 %v231, 126
      %v236 = vpop.permute.xlu0 %235
      %237 = vrot.lane.b32.xlu0 %v232, 126
      %v238 = vpop.permute.xlu0 %237
      %v241 = vadd.f32 %v228, %v236
      %v242 = vadd.f32 %v229, %v238
      %s243 = scalar_lea.vmem %s111, 176
      %v244 = vld [vmem:[%s243 + $0x1] sm:$0xff]
      %v245 = vld [vmem:[%s243 + $0x9] sm:$0x1]
      %248 = vrot.lane.b32.xlu0 %v244, 125
      %v249 = vpop.permute.xlu0 %248
      %250 = vrot.lane.b32.xlu0 %v245, 125
      %v251 = vpop.permute.xlu0 %250
      %v254 = vadd.f32 %v241, %v249
      %v255 = vadd.f32 %v242, %v251
      %s256 = scalar_lea.vmem %s111, 192
      %v257 = vld [vmem:[%s256 + $0x1] sm:$0xff]
      %v258 = vld [vmem:[%s256 + $0x9] sm:$0x1]
      %261 = vrot.lane.b32.xlu0 %v257, 124
      %v262 = vpop.permute.xlu0 %261
      %263 = vrot.lane.b32.xlu0 %v258, 124
      %v264 = vpop.permute.xlu0 %263
      %v267 = vadd.f32 %v254, %v262
      %v268 = vadd.f32 %v255, %v264
      %s269 = scalar_lea.vmem %s111, 208
      %v270 = vld [vmem:[%s269 + $0x1] sm:$0xff]
      %v271 = vld [vmem:[%s269 + $0x9] sm:$0x1]
      %274 = vrot.lane.b32.xlu0 %v270, 123
      %v275 = vpop.permute.xlu0 %274
      %276 = vrot.lane.b32.xlu0 %v271, 123
      %v277 = vpop.permute.xlu0 %276
      %v280 = vadd.f32 %v267, %v275
      %v281 = vadd.f32 %v268, %v277
      %s282 = scalar_lea.vmem %s111, 224
      %v283 = vld [vmem:[%s282 + $0x1] sm:$0xff]
      %v284 = vld [vmem:[%s282 + $0x9] sm:$0x1]
      %287 = vrot.lane.b32.xlu0 %v283, 122
      %v288 = vpop.permute.xlu0 %287
      %289 = vrot.lane.b32.xlu0 %v284, 122
      %v290 = vpop.permute.xlu0 %289
      %v293 = vadd.f32 %v280, %v288
      %v294 = vadd.f32 %v281, %v290
      %s295 = scalar_lea.vmem %s111, 240
      %v296 = vld [vmem:[%s295 + $0x1] sm:$0xff]
      %v297 = vld [vmem:[%s295 + $0x9] sm:$0x1]
      %300 = vrot.lane.b32.xlu0 %v296, 121
      %v301 = vpop.permute.xlu0 %300
      %302 = vrot.lane.b32.xlu0 %v297, 121
      %v303 = vpop.permute.xlu0 %302
      %v306 = vadd.f32 %v293, %v301
      %v307 = vadd.f32 %v294, %v303
      %s308 = scalar_lea.vmem %s111, 256
      %v309 = vld [vmem:[%s308 + $0x2] sm:$0xff]
      %v310 = vld [vmem:[%s308 + $0xa] sm:$0x1]
      %v311 = vadd.f32 %v306, %v309
      %v312 = vadd.f32 %v307, %v310
      %s313 = scalar_lea.vmem %s111, 272
      %v314 = vld [vmem:[%s313 + $0x2] sm:$0xff]
      %v315 = vld [vmem:[%s313 + $0xa] sm:$0x1]
      %318 = vrot.lane.b32.xlu0 %v314, 127
      %v319 = vpop.permute.xlu0 %318
      %320 = vrot.lane.b32.xlu0 %v315, 127
      %v321 = vpop.permute.xlu0 %320
      %v324 = vadd.f32 %v311, %v319
      %v325 = vadd.f32 %v312, %v321
      %s326 = scalar_lea.vmem %s111, 288
      %v327 = vld [vmem:[%s326 + $0x2] sm:$0xff]
      %v328 = vld [vmem:[%s326 + $0xa] sm:$0x1]
      %331 = vrot.lane.b32.xlu0 %v327, 126
      %v332 = vpop.permute.xlu0 %331
      %333 = vrot.lane.b32.xlu0 %v328, 126
      %v334 = vpop.permute.xlu0 %333
      %v337 = vadd.f32 %v324, %v332
      %v338 = vadd.f32 %v325, %v334
      %s339 = scalar_lea.vmem %s111, 304
      %v340 = vld [vmem:[%s339 + $0x2] sm:$0xff]
      %v341 = vld [vmem:[%s339 + $0xa] sm:$0x1]
      %344 = vrot.lane.b32.xlu0 %v340, 125
      %v345 = vpop.permute.xlu0 %344
      %346 = vrot.lane.b32.xlu0 %v341, 125
      %v347 = vpop.permute.xlu0 %346
      %v350 = vadd.f32 %v337, %v345
      %v351 = vadd.f32 %v338, %v347
      %s352 = scalar_lea.vmem %s111, 320
      %v353 = vld [vmem:[%s352 + $0x2] sm:$0xff]
      %v354 = vld [vmem:[%s352 + $0xa] sm:$0x1]
      %357 = vrot.lane.b32.xlu0 %v353, 124
      %v358 = vpop.permute.xlu0 %357
      %359 = vrot.lane.b32.xlu0 %v354, 124
      %v360 = vpop.permute.xlu0 %359
      %v363 = vadd.f32 %v350, %v358
      %v364 = vadd.f32 %v351, %v360
      %s365 = scalar_lea.vmem %s111, 336
      %v366 = vld [vmem:[%s365 + $0x2] sm:$0xff]
      %v367 = vld [vmem:[%s365 + $0xa] sm:$0x1]
      %370 = vrot.lane.b32.xlu0 %v366, 123
      %v371 = vpop.permute.xlu0 %370
      %372 = vrot.lane.b32.xlu0 %v367, 123
      %v373 = vpop.permute.xlu0 %372
      %v376 = vadd.f32 %v363, %v371
      %v377 = vadd.f32 %v364, %v373
      %s378 = scalar_lea.vmem %s111, 352
      %v379 = vld [vmem:[%s378 + $0x2] sm:$0xff]
      %v380 = vld [vmem:[%s378 + $0xa] sm:$0x1]
      %383 = vrot.lane.b32.xlu0 %v379, 122
      %v384 = vpop.permute.xlu0 %383
      %385 = vrot.lane.b32.xlu0 %v380, 122
      %v386 = vpop.permute.xlu0 %385
      %v389 = vadd.f32 %v376, %v384
      %v390 = vadd.f32 %v377, %v386
      %s391 = scalar_lea.vmem %s111, 368
      %v392 = vld [vmem:[%s391 + $0x2] sm:$0xff]
      %v393 = vld [vmem:[%s391 + $0xa] sm:$0x1]
      %396 = vrot.lane.b32.xlu0 %v392, 121
      %v397 = vpop.permute.xlu0 %396
      %398 = vrot.lane.b32.xlu0 %v393, 121
      %v399 = vpop.permute.xlu0 %398
      %v402 = vadd.f32 %v389, %v397
      %v403 = vadd.f32 %v390, %v399
      %s404 = scalar_lea.vmem %s111, 384
      %v405 = vld [vmem:[%s404 + $0x3] sm:$0xff]
      %v406 = vld [vmem:[%s404 + $0xb] sm:$0x1]
      %v407 = vadd.f32 %v402, %v405
      %v408 = vadd.f32 %v403, %v406
      %s409 = scalar_lea.vmem %s111, 400
      %v410 = vld [vmem:[%s409 + $0x3] sm:$0xff]
      %v411 = vld [vmem:[%s409 + $0xb] sm:$0x1]
      %414 = vrot.lane.b32.xlu0 %v410, 127
      %v415 = vpop.permute.xlu0 %414
      %416 = vrot.lane.b32.xlu0 %v411, 127
      %v417 = vpop.permute.xlu0 %416
      %v420 = vadd.f32 %v407, %v415
      %v421 = vadd.f32 %v408, %v417
      %s422 = scalar_lea.vmem %s111, 416
      %v423 = vld [vmem:[%s422 + $0x3] sm:$0xff]
      %v424 = vld [vmem:[%s422 + $0xb] sm:$0x1]
      %427 = vrot.lane.b32.xlu0 %v423, 126
      %v428 = vpop.permute.xlu0 %427
      %429 = vrot.lane.b32.xlu0 %v424, 126
      %v430 = vpop.permute.xlu0 %429
      %v433 = vadd.f32 %v420, %v428
      %v434 = vadd.f32 %v421, %v430
      %s435 = scalar_lea.vmem %s111, 432
      %v436 = vld [vmem:[%s435 + $0x3] sm:$0xff]
      %v437 = vld [vmem:[%s435 + $0xb] sm:$0x1]
      %440 = vrot.lane.b32.xlu0 %v436, 125
      %v441 = vpop.permute.xlu0 %440
      %442 = vrot.lane.b32.xlu0 %v437, 125
      %v443 = vpop.permute.xlu0 %442
      %v446 = vadd.f32 %v433, %v441
      %v447 = vadd.f32 %v434, %v443
      %s448 = scalar_lea.vmem %s111, 448
      %v449 = vld [vmem:[%s448 + $0x3] sm:$0xff]
      %v450 = vld [vmem:[%s448 + $0xb] sm:$0x1]
      %453 = vrot.lane.b32.xlu0 %v449, 124
      %v454 = vpop.permute.xlu0 %453
      %455 = vrot.lane.b32.xlu0 %v450, 124
      %v456 = vpop.permute.xlu0 %455
      %v459 = vadd.f32 %v446, %v454
      %v460 = vadd.f32 %v447, %v456
      %s461 = scalar_lea.vmem %s111, 464
      %v462 = vld [vmem:[%s461 + $0x3] sm:$0xff]
      %v463 = vld [vmem:[%s461 + $0xb] sm:$0x1]
      %466 = vrot.lane.b32.xlu0 %v462, 123
      %v467 = vpop.permute.xlu0 %466
      %468 = vrot.lane.b32.xlu0 %v463, 123
      %v469 = vpop.permute.xlu0 %468
      %v472 = vadd.f32 %v459, %v467
      %v473 = vadd.f32 %v460, %v469
      %s474 = scalar_lea.vmem %s111, 480
      %v475 = vld [vmem:[%s474 + $0x3] sm:$0xff]
      %v476 = vld [vmem:[%s474 + $0xb] sm:$0x1]
      %479 = vrot.lane.b32.xlu0 %v475, 122
      %v480 = vpop.permute.xlu0 %479
      %481 = vrot.lane.b32.xlu0 %v476, 122
      %v482 = vpop.permute.xlu0 %481
      %v485 = vadd.f32 %v472, %v480
      %v486 = vadd.f32 %v473, %v482
      %s487 = scalar_lea.vmem %s111, 496
      %v488 = vld [vmem:[%s487 + $0x3] sm:$0xff]
      %v489 = vld [vmem:[%s487 + $0xb] sm:$0x1]
      %492 = vrot.lane.b32.xlu0 %v488, 121
      %v493 = vpop.permute.xlu0 %492
      %494 = vrot.lane.b32.xlu0 %v489, 121
      %v495 = vpop.permute.xlu0 %494
      %v498 = vadd.f32 %v485, %v493
      %v499 = vadd.f32 %v486, %v495
      %s500 = scalar_lea.vmem %s111, 512
      %v501 = vld [vmem:[%s500 + $0x4] sm:$0xff]
      %v502 = vld [vmem:[%s500 + $0xc] sm:$0x1]
      %v503 = vadd.f32 %v498, %v501
      %v504 = vadd.f32 %v499, %v502
      %s505 = scalar_lea.vmem %s111, 528
      %v506 = vld [vmem:[%s505 + $0x4] sm:$0xff]
      %v507 = vld [vmem:[%s505 + $0xc] sm:$0x1]
      %510 = vrot.lane.b32.xlu0 %v506, 127
      %v511 = vpop.permute.xlu0 %510
      %512 = vrot.lane.b32.xlu0 %v507, 127
      %v513 = vpop.permute.xlu0 %512
      %v516 = vadd.f32 %v503, %v511
      %v517 = vadd.f32 %v504, %v513
      %s518 = scalar_lea.vmem %s111, 544
      %v519 = vld [vmem:[%s518 + $0x4] sm:$0xff]
      %v520 = vld [vmem:[%s518 + $0xc] sm:$0x1]
      %523 = vrot.lane.b32.xlu0 %v519, 126
      %v524 = vpop.permute.xlu0 %523
      %525 = vrot.lane.b32.xlu0 %v520, 126
      %v526 = vpop.permute.xlu0 %525
      %v529 = vadd.f32 %v516, %v524
      %v530 = vadd.f32 %v517, %v526
      %s531 = scalar_lea.vmem %s111, 560
      %v532 = vld [vmem:[%s531 + $0x4] sm:$0xff]
      %v533 = vld [vmem:[%s531 + $0xc] sm:$0x1]
      %536 = vrot.lane.b32.xlu0 %v532, 125
      %v537 = vpop.permute.xlu0 %536
      %538 = vrot.lane.b32.xlu0 %v533, 125
      %v539 = vpop.permute.xlu0 %538
      %v542 = vadd.f32 %v529, %v537
      %v543 = vadd.f32 %v530, %v539
      %s544 = scalar_lea.vmem %s111, 576
      %v545 = vld [vmem:[%s544 + $0x4] sm:$0xff]
      %v546 = vld [vmem:[%s544 + $0xc] sm:$0x1]
      %549 = vrot.lane.b32.xlu0 %v545, 124
      %v550 = vpop.permute.xlu0 %549
      %551 = vrot.lane.b32.xlu0 %v546, 124
      %v552 = vpop.permute.xlu0 %551
      %v555 = vadd.f32 %v542, %v550
      %v556 = vadd.f32 %v543, %v552
      %s557 = scalar_lea.vmem %s111, 592
      %v558 = vld [vmem:[%s557 + $0x4] sm:$0xff]
      %v559 = vld [vmem:[%s557 + $0xc] sm:$0x1]
      %562 = vrot.lane.b32.xlu0 %v558, 123
      %v563 = vpop.permute.xlu0 %562
      %564 = vrot.lane.b32.xlu0 %v559, 123
      %v565 = vpop.permute.xlu0 %564
      %v568 = vadd.f32 %v555, %v563
      %v569 = vadd.f32 %v556, %v565
      %s570 = scalar_lea.vmem %s111, 608
      %v571 = vld [vmem:[%s570 + $0x4] sm:$0xff]
      %v572 = vld [vmem:[%s570 + $0xc] sm:$0x1]
      %575 = vrot.lane.b32.xlu0 %v571, 122
      %v576 = vpop.permute.xlu0 %575
      %577 = vrot.lane.b32.xlu0 %v572, 122
      %v578 = vpop.permute.xlu0 %577
      %v581 = vadd.f32 %v568, %v576
      %v582 = vadd.f32 %v569, %v578
      %s583 = scalar_lea.vmem %s111, 624
      %v584 = vld [vmem:[%s583 + $0x4] sm:$0xff]
      %v585 = vld [vmem:[%s583 + $0xc] sm:$0x1]
      %588 = vrot.lane.b32.xlu0 %v584, 121
      %v589 = vpop.permute.xlu0 %588
      %590 = vrot.lane.b32.xlu0 %v585, 121
      %v591 = vpop.permute.xlu0 %590
      %v594 = vadd.f32 %v581, %v589
      %v595 = vadd.f32 %v582, %v591
      %s596 = scalar_lea.vmem %s111, 640
      %v597 = vld [vmem:[%s596 + $0x5] sm:$0xff]
      %v598 = vld [vmem:[%s596 + $0xd] sm:$0x1]
      %v599 = vadd.f32 %v594, %v597
      %v600 = vadd.f32 %v595, %v598
      %s601 = scalar_lea.vmem %s111, 656
      %v602 = vld [vmem:[%s601 + $0x5] sm:$0xff]
      %v603 = vld [vmem:[%s601 + $0xd] sm:$0x1]
      %606 = vrot.lane.b32.xlu0 %v602, 127
      %v607 = vpop.permute.xlu0 %606
      %608 = vrot.lane.b32.xlu0 %v603, 127
      %v609 = vpop.permute.xlu0 %608
      %v612 = vadd.f32 %v599, %v607
      %v613 = vadd.f32 %v600, %v609
      %s614 = scalar_lea.vmem %s111, 672
      %v615 = vld [vmem:[%s614 + $0x5] sm:$0xff]
      %v616 = vld [vmem:[%s614 + $0xd] sm:$0x1]
      %619 = vrot.lane.b32.xlu0 %v615, 126
      %v620 = vpop.permute.xlu0 %619
      %621 = vrot.lane.b32.xlu0 %v616, 126
      %v622 = vpop.permute.xlu0 %621
      %v625 = vadd.f32 %v612, %v620
      %v626 = vadd.f32 %v613, %v622
      %s627 = scalar_lea.vmem %s111, 688
      %v628 = vld [vmem:[%s627 + $0x5] sm:$0xff]
      %v629 = vld [vmem:[%s627 + $0xd] sm:$0x1]
      %632 = vrot.lane.b32.xlu0 %v628, 125
      %v633 = vpop.permute.xlu0 %632
      %634 = vrot.lane.b32.xlu0 %v629, 125
      %v635 = vpop.permute.xlu0 %634
      %v638 = vadd.f32 %v625, %v633
      %v639 = vadd.f32 %v626, %v635
      %s640 = scalar_lea.vmem %s111, 704
      %v641 = vld [vmem:[%s640 + $0x5] sm:$0xff]
      %v642 = vld [vmem:[%s640 + $0xd] sm:$0x1]
      %645 = vrot.lane.b32.xlu0 %v641, 124
      %v646 = vpop.permute.xlu0 %645
      %647 = vrot.lane.b32.xlu0 %v642, 124
      %v648 = vpop.permute.xlu0 %647
      %v651 = vadd.f32 %v638, %v646
      %v652 = vadd.f32 %v639, %v648
      %s653 = scalar_lea.vmem %s111, 720
      %v654 = vld [vmem:[%s653 + $0x5] sm:$0xff]
      %v655 = vld [vmem:[%s653 + $0xd] sm:$0x1]
      %658 = vrot.lane.b32.xlu0 %v654, 123
      %v659 = vpop.permute.xlu0 %658
      %660 = vrot.lane.b32.xlu0 %v655, 123
      %v661 = vpop.permute.xlu0 %660
      %v664 = vadd.f32 %v651, %v659
      %v665 = vadd.f32 %v652, %v661
      %s666 = scalar_lea.vmem %s111, 736
      %v667 = vld [vmem:[%s666 + $0x5] sm:$0xff]
      %v668 = vld [vmem:[%s666 + $0xd] sm:$0x1]
      %671 = vrot.lane.b32.xlu0 %v667, 122
      %v672 = vpop.permute.xlu0 %671
      %673 = vrot.lane.b32.xlu0 %v668, 122
      %v674 = vpop.permute.xlu0 %673
      %v677 = vadd.f32 %v664, %v672
      %v678 = vadd.f32 %v665, %v674
      %s679 = scalar_lea.vmem %s111, 752
      %v680 = vld [vmem:[%s679 + $0x5] sm:$0xff]
      %v681 = vld [vmem:[%s679 + $0xd] sm:$0x1]
      %684 = vrot.lane.b32.xlu0 %v680, 121
      %v685 = vpop.permute.xlu0 %684
      %686 = vrot.lane.b32.xlu0 %v681, 121
      %v687 = vpop.permute.xlu0 %686
      %v690 = vadd.f32 %v677, %v685
      %v691 = vadd.f32 %v678, %v687
      %s692 = scalar_lea.vmem %s111, 768
      %v693 = vld [vmem:[%s692 + $0x6] sm:$0xff]
      %v694 = vld [vmem:[%s692 + $0xe] sm:$0x1]
      %v695 = vadd.f32 %v690, %v693
      %v696 = vadd.f32 %v691, %v694
      %s697 = scalar_lea.vmem %s111, 784
      %v698 = vld [vmem:[%s697 + $0x6] sm:$0xff]
      %v699 = vld [vmem:[%s697 + $0xe] sm:$0x1]
      %702 = vrot.lane.b32.xlu0 %v698, 127
      %v703 = vpop.permute.xlu0 %702
      %704 = vrot.lane.b32.xlu0 %v699, 127
      %v705 = vpop.permute.xlu0 %704
      %v708 = vadd.f32 %v695, %v703
      %v709 = vadd.f32 %v696, %v705
      %s710 = scalar_lea.vmem %s111, 800
      %v711 = vld [vmem:[%s710 + $0x6] sm:$0xff]
      %v712 = vld [vmem:[%s710 + $0xe] sm:$0x1]
      %715 = vrot.lane.b32.xlu0 %v711, 126
      %v716 = vpop.permute.xlu0 %715
      %717 = vrot.lane.b32.xlu0 %v712, 126
      %v718 = vpop.permute.xlu0 %717
      %v721 = vadd.f32 %v708, %v716
      %v722 = vadd.f32 %v709, %v718
      %s723 = scalar_lea.vmem %s111, 816
      %v724 = vld [vmem:[%s723 + $0x6] sm:$0xff]
      %v725 = vld [vmem:[%s723 + $0xe] sm:$0x1]
      %728 = vrot.lane.b32.xlu0 %v724, 125
      %v729 = vpop.permute.xlu0 %728
      %730 = vrot.lane.b32.xlu0 %v725, 125
      %v731 = vpop.permute.xlu0 %730
      %v734 = vadd.f32 %v721, %v729
      %v735 = vadd.f32 %v722, %v731
      %s736 = scalar_lea.vmem %s111, 832
      %v737 = vld [vmem:[%s736 + $0x6] sm:$0xff]
      %v738 = vld [vmem:[%s736 + $0xe] sm:$0x1]
      %741 = vrot.lane.b32.xlu0 %v737, 124
      %v742 = vpop.permute.xlu0 %741
      %743 = vrot.lane.b32.xlu0 %v738, 124
      %v744 = vpop.permute.xlu0 %743
      %v747 = vadd.f32 %v734, %v742
      %v748 = vadd.f32 %v735, %v744
      %s749 = scalar_lea.vmem %s111, 848
      %v750 = vld [vmem:[%s749 + $0x6] sm:$0xff]
      %v751 = vld [vmem:[%s749 + $0xe] sm:$0x1]
      %754 = vrot.lane.b32.xlu0 %v750, 123
      %v755 = vpop.permute.xlu0 %754
      %756 = vrot.lane.b32.xlu0 %v751, 123
      %v757 = vpop.permute.xlu0 %756
      %v760 = vadd.f32 %v747, %v755
      %v761 = vadd.f32 %v748, %v757
      %s762 = scalar_lea.vmem %s111, 864
      %v763 = vld [vmem:[%s762 + $0x6] sm:$0xff]
      %v764 = vld [vmem:[%s762 + $0xe] sm:$0x1]
      %767 = vrot.lane.b32.xlu0 %v763, 122
      %v768 = vpop.permute.xlu0 %767
      %769 = vrot.lane.b32.xlu0 %v764, 122
      %v770 = vpop.permute.xlu0 %769
      %v773 = vadd.f32 %v760, %v768
      %v774 = vadd.f32 %v761, %v770
      %s775 = scalar_lea.vmem %s111, 880
      %v776 = vld [vmem:[%s775 + $0x6] sm:$0xff]
      %v777 = vld [vmem:[%s775 + $0xe] sm:$0x1]
      %780 = vrot.lane.b32.xlu0 %v776, 121
      %v781 = vpop.permute.xlu0 %780
      %782 = vrot.lane.b32.xlu0 %v777, 121
      %v783 = vpop.permute.xlu0 %782
      %v786 = vadd.f32 %v773, %v781
      %v787 = vadd.f32 %v774, %v783
      %s788 = scalar_lea.vmem %s111, 896
      %v789 = vld [vmem:[%s788 + $0x7] sm:$0xff]
      %v790 = vld [vmem:[%s788 + $0xf] sm:$0x1]
      %v791 = vadd.f32 %v786, %v789
      %v792 = vadd.f32 %v787, %v790
      %s793 = scalar_lea.vmem %s111, 912
      %v794 = vld [vmem:[%s793 + $0x7] sm:$0xff]
      %v795 = vld [vmem:[%s793 + $0xf] sm:$0x1]
      %798 = vrot.lane.b32.xlu0 %v794, 127
      %v799 = vpop.permute.xlu0 %798
      %800 = vrot.lane.b32.xlu0 %v795, 127
      %v801 = vpop.permute.xlu0 %800
      %v804 = vadd.f32 %v791, %v799
      %v805 = vadd.f32 %v792, %v801
      %s806 = scalar_lea.vmem %s111, 928
      %v807 = vld [vmem:[%s806 + $0x7] sm:$0xff]
      %v808 = vld [vmem:[%s806 + $0xf] sm:$0x1]
      %811 = vrot.lane.b32.xlu0 %v807, 126
      %v812 = vpop.permute.xlu0 %811
      %813 = vrot.lane.b32.xlu0 %v808, 126
      %v814 = vpop.permute.xlu0 %813
      %v817 = vadd.f32 %v804, %v812
      %v818 = vadd.f32 %v805, %v814
      %s819 = scalar_lea.vmem %s111, 944
      %v820 = vld [vmem:[%s819 + $0x7] sm:$0xff]
      %v821 = vld [vmem:[%s819 + $0xf] sm:$0x1]
      %824 = vrot.lane.b32.xlu0 %v820, 125
      %v825 = vpop.permute.xlu0 %824
      %826 = vrot.lane.b32.xlu0 %v821, 125
      %v827 = vpop.permute.xlu0 %826
      %v830 = vadd.f32 %v817, %v825
      %v831 = vadd.f32 %v818, %v827
      %s832 = scalar_lea.vmem %s111, 960
      %v833 = vld [vmem:[%s832 + $0x7] sm:$0xff]
      %v834 = vld [vmem:[%s832 + $0xf] sm:$0x1]
      %837 = vrot.lane.b32.xlu0 %v833, 124
      %v838 = vpop.permute.xlu0 %837
      %839 = vrot.lane.b32.xlu0 %v834, 124
      %v840 = vpop.permute.xlu0 %839
      %v843 = vadd.f32 %v830, %v838
      %v844 = vadd.f32 %v831, %v840
      %s845 = scalar_lea.vmem %s111, 976
      %v846 = vld [vmem:[%s845 + $0x7] sm:$0xff]
      %v847 = vld [vmem:[%s845 + $0xf] sm:$0x1]
      %850 = vrot.lane.b32.xlu0 %v846, 123
      %v851 = vpop.permute.xlu0 %850
      %852 = vrot.lane.b32.xlu0 %v847, 123
      %v853 = vpop.permute.xlu0 %852
      %v856 = vadd.f32 %v843, %v851
      %v857 = vadd.f32 %v844, %v853
      %s858 = scalar_lea.vmem %s111, 992
      %v859 = vld [vmem:[%s858 + $0x7] sm:$0xff]
      %v860 = vld [vmem:[%s858 + $0xf] sm:$0x1]
      %863 = vrot.lane.b32.xlu0 %v859, 122
      %v864 = vpop.permute.xlu0 %863
      %865 = vrot.lane.b32.xlu0 %v860, 122
      %v866 = vpop.permute.xlu0 %865
      %v869 = vadd.f32 %v856, %v864
      %v870 = vadd.f32 %v857, %v866
      %s871 = scalar_lea.vmem %s111, 1008
      %v872 = vld [vmem:[%s871 + $0x7] sm:$0xff]
      %v873 = vld [vmem:[%s871 + $0xf] sm:$0x1]
      %876 = vrot.lane.b32.xlu0 %v872, 121
      %v877 = vpop.permute.xlu0 %876
      %878 = vrot.lane.b32.xlu0 %v873, 121
      %v879 = vpop.permute.xlu0 %878
      %v882 = vadd.f32 %v869, %v877
      %v883 = vadd.f32 %v870, %v879
      %v884 = vmul.f32 %v882, 0.001
      %v885 = vmul.f32 %v883, 0.001
      %v886 = vadd.f32 %v884, 0.0
      %v887 = vadd.f32 %v885, 0.0
      %vm888 = vcmask 72704
      %889 = vst.msk [vmem:[%s116] sm:$0xff] %vm888, %v886
      %vm890 = vcmask 65536
      %891 = vst.msk [vmem:[%s116 + $0x8] sm:$0x1] %vm890, %v887
      %p892 = scmp.lt.s32.totalorder %s12, 1
      %s893 = scalar_select %p892, %s12, 1
      %s894 = smul.addr %s893, 2
      %s895 = smul.addr %s894, 8
      %s896 = scalar_lea.vmem %s1, %s895
      // Predicated region
      $region25: #{_tracker_forward.5} parent=23 // pred_check
        %p897 = pneg %p56
      $region26: #{_tracker_forward.5} parent=23 // pred_check_branch
        %899 = sbr.rel (%p897) target = $region28
      $region27: #{_tracker_forward.5} parent=23 // pred_region
        _
      $region28: #{_tracker_forward.5} parent=23 // pred_fallthru
        _
    $region24: #{_tracker_forward.5} parent=5 // pred_fallthru
      _
    %p900 = scmp.le.s32.totalorder 2, %s7
    // Predicated region
    $region29: #{_tracker_forward.5} parent=5 // pred_check
      %p901 = pneg %p900
    $region30: #{_tracker_forward.5} parent=5 // pred_check_branch
      %903 = sbr.rel (%p901) target = $region32
    $region31: #{_tracker_forward.5} parent=5 // pred_region
      %s904 = ssub.s32 %s7, 2
      // Predicated region
      $region33: #{_tracker_forward.5} parent=31 // pred_check
        %p905 = pneg %p62
      $region34: #{_tracker_forward.5} parent=31 // pred_check_branch
        %907 = sbr.rel (%p905) target = $region36
      $region35: #{_tracker_forward.5} parent=31 // pred_region
        %p908 = scmp.lt.s32.totalorder %s13, 1
        %s909 = scalar_select %p908, %s13, 1
        %s910 = smul.addr %s909, 2
        %s911 = smul.addr %s910, 8
        %s912 = scalar_lea.vmem %s1, %s911
      $region36: #{_tracker_forward.5} parent=31 // pred_fallthru
        _
    $region32: #{_tracker_forward.5} parent=5 // pred_fallthru
      _
  $region6: #{_tracker_forward.5} parent=0 // loop_footer
    %s11 = sadd.s32 1, %s7
  $region7: #{_tracker_forward.5} parent=0 // loop_footer_branch
    %6 = sbr.rel target = $region3
  $region8: #{_tracker_forward.5} parent=0 // loop_exit
    _

</llo_original>
